<compile_context>
chip_gen: v6e
topology: v6e:2x2x1
jax: 0.10.0
libtpu: 0.0.40
codegen_flags: <defaults>
</compile_context>

<pallas_src>
import functools

import jax
import jax.numpy as jnp
import numpy as np
from jax.experimental import pallas as pl
from jax.experimental.pallas import tpu as pltpu


# ----------------------------------------------------------------------------
# Fused kernel
# ----------------------------------------------------------------------------
def _act(y, kind):
    if kind == "Swish":
        return y * jax.nn.sigmoid(y)
    if kind == "ReLU":
        return jnp.maximum(y, 0.0)
    return y


def _mixnet_block_kernel(*args, kernel_sizes, split_channels, tap_shifts,
                         act, expand, use_se, add_residual):
    """One batch element per grid step. Activations are lane-dense (C, H*W) f32."""
    in_refs, o_ref = args[:-1], args[-1]
    it = iter(in_refs)

    x_ref = next(it)
    x_t = x_ref[0]                                            # (Cin, HW) f32

    # ---- 1x1 expansion + BN (scale folded into weight) + act ----------------
    if expand:
        w_exp_ref = next(it)                                  # (Cexp, Cin) bf16
        exp_shift_ref = next(it)                              # (Cexp, 1)   f32
        h = jnp.dot(w_exp_ref[...], x_t.astype(jnp.bfloat16),
                    preferred_element_type=jnp.float32)
        h = _act(h + exp_shift_ref[...], act)                 # (Cexp, HW) f32
    else:
        h = x_t

    # ---- MDConv: per-group depthwise conv via lane rolls ---------------------
    # Boundary mask x BN-folded weight are pre-combined per tap on the host, so
    # each tap is one roll (XLU) + one multiply (VPU) + one add.
    group_mw = [next(it) for _ in kernel_sizes]               # (k*k, cg, HW) f32
    dw_shift_ref = next(it)                                   # (Cexp, 1)    f32

    dw_groups = []
    c0 = 0
    for gi, _k in enumerate(kernel_sizes):
        cg = split_channels[gi]
        h_g = h[c0:c0 + cg, :]                                # sublane-aligned slice
        mw_ref = group_mw[gi]
        acc = None
        for t, s in enumerate(tap_shifts[gi]):
            # pltpu.roll matches jnp.roll: out[i] = in[(i - s) mod HW]; the host
            # chose s so this reads in[i + tap_offset]; mw zeroes wrapped taps.
            tap = h_g if s == 0 else pltpu.roll(h_g, s, axis=1)
            term = tap * mw_ref[t]
            acc = term if acc is None else acc + term
        dw_groups.append(acc)
        c0 += cg
    # One contiguous (Cexp, HW) buffer (groups occupy contiguous sublane ranges).
    dw = dw_groups[0] if len(dw_groups) == 1 else jnp.concatenate(dw_groups, axis=0)
    dw = _act(dw + dw_shift_ref[...], act)                    # (Cexp, HW) f32

    # ---- Squeeze-and-Excite: pool first, then tiny matvecs -------------------
    if use_se:
        w_se1_ref = next(it)                                  # (Cs, Cexp) f32
        b_se1_ref = next(it)                                  # (Cs, 1)    f32
        w_se2_ref = next(it)                                  # (Cexp, Cs) f32
        b_se2_ref = next(it)                                  # (Cexp, 1)  f32
        pooled = jnp.mean(dw, axis=1, keepdims=True)          # (Cexp, 1)
        hid = jnp.dot(w_se1_ref[...], pooled,
                      preferred_element_type=jnp.float32) + b_se1_ref[...]
        hid = hid * jax.nn.sigmoid(hid)                       # Swish, (Cs, 1)
        gate = jax.nn.sigmoid(
            jnp.dot(w_se2_ref[...], hid,
                    preferred_element_type=jnp.float32) + b_se2_ref[...])  # (Cexp, 1)
        dw = dw * gate                                        # lane-broadcast gate

    # ---- 1x1 projection + BN (scale folded) + residual -----------------------
    w_proj_ref = next(it)                                     # (Cout, Cexp) bf16
    proj_shift_ref = next(it)                                 # (Cout, 1)    f32
    out = jnp.dot(w_proj_ref[...], dw.astype(jnp.bfloat16),
                  preferred_element_type=jnp.float32) + proj_shift_ref[...]
    if add_residual:
        out = out + x_t
    o_ref[0] = out.astype(o_ref.dtype)


# ----------------------------------------------------------------------------
# Host-side preparation (BN folding, lane-dense weight layouts, combined
# mask*weight tap tables + roll shifts)
# ----------------------------------------------------------------------------
def _make_tap_tables(k, H, W, w_taps):
    """Combined (boundary mask x BN-folded weight) per tap, plus roll shifts.

    w_taps: (k*k, cg) BN-scale-folded depthwise weights (numpy).
    Returns mw (k*k, cg, HW) f32 and the per-tap lane-roll shifts.
    """
    p = k // 2
    HW = H * W
    yy, xx = np.meshgrid(np.arange(H), np.arange(W), indexing="ij")
    yy, xx = yy.reshape(-1), xx.reshape(-1)
    cg = w_taps.shape[1]
    mw = np.zeros((k * k, cg, HW), np.float32)
    shifts = []
    t = 0
    for dy in range(k):
        for dx in range(k):
            oy, ox = dy - p, dx - p
            valid = ((yy + oy >= 0) & (yy + oy < H) &
                     (xx + ox >= 0) & (xx + ox < W)).astype(np.float32)
            mw[t] = w_taps[t][:, None] * valid[None, :]
            # want shifted[i] = x[i + oy*W + ox]  =>  roll shift of -(oy*W + ox)
            shifts.append(int((-(oy * W + ox)) % HW))
            t += 1
    return jnp.asarray(mw), tuple(shifts)


def _prepare_inputs(x_nchw, p, cfg):
    N, Cin, H, W = x_nchw.shape
    HW = H * W
    ks, sc = cfg["kernel_size"], cfg["split_channels"]

    inputs = [x_nchw.reshape(N, Cin, HW)]
    if cfg["expand"]:
        inputs += [(p["w_exp"] * p["exp_scale"]).T.astype(jnp.bfloat16),  # (Cexp, Cin)
                   p["exp_shift"].reshape(-1, 1)]                          # (Cexp, 1)

    tap_shifts = []
    c0 = 0
    dw_scale = np.asarray(p["dw_scale"])[0]
    for gi, k in enumerate(ks):
        cg = sc[gi]
        w_taps = (np.asarray(p["w_dw"][gi]).reshape(k * k, cg)
                  * dw_scale[None, c0:c0 + cg])               # BN scale folded
        mw, shifts = _make_tap_tables(k, H, W, w_taps)
        inputs.append(mw)                                     # (k*k, cg, HW)
        tap_shifts.append(shifts)
        c0 += cg
    inputs.append(p["dw_shift"].reshape(-1, 1))               # (Cexp, 1)

    if cfg["se"]:
        inputs += [p["w_se1"].T,                              # (Cs, Cexp)
                   p["b_se1"].reshape(-1, 1),                 # (Cs, 1)
                   p["w_se2"].T,                              # (Cexp, Cs)
                   p["b_se2"].reshape(-1, 1)]                 # (Cexp, 1)

    inputs += [(p["w_proj"] * p["proj_scale"]).T.astype(jnp.bfloat16),  # (Cout, Cexp)
               p["proj_shift"].reshape(-1, 1)]                          # (Cout, 1)
    return inputs, tuple(tap_shifts)


def mixnet_block_forward(x_nchw, p, cfg):
    """Fused MixNetBlock forward. Input/output are NCHW (PyTorch layout)."""
    N, Cin, H, W = x_nchw.shape
    HW = H * W
    Cout = cfg["out_channels"]

    inputs, tap_shifts = _prepare_inputs(x_nchw, p, cfg)

    kernel = functools.partial(
        _mixnet_block_kernel,
        kernel_sizes=tuple(cfg["kernel_size"]),
        split_channels=tuple(cfg["split_channels"]),
        tap_shifts=tap_shifts,
        act=cfg["non_linear"],
        expand=cfg["expand"],
        use_se=cfg["se"],
        add_residual=cfg["residual"],
    )

    # Weights / tap tables: full-array blocks, constant index maps (VMEM-resident).
    in_specs = [pl.BlockSpec((1, Cin, HW), lambda n: (n, 0, 0))]
    for arr in inputs[1:]:
        in_specs.append(pl.BlockSpec(arr.shape, lambda n, _r=arr.ndim: (0,) * _r))

    out = pl.pallas_call(
        kernel,
        out_shape=jax.ShapeDtypeStruct((N, Cout, HW), jnp.float32),
        grid=(N,),
        in_specs=in_specs,
        out_specs=pl.BlockSpec((1, Cout, HW), lambda n: (n, 0, 0)),
        compiler_params=pltpu.CompilerParams(dimension_semantics=("parallel",)),
    )(*inputs)
    return out.reshape(N, Cout, H, W)


# ----------------------------------------------------------------------------
# Pure-JAX reference (independent f32 NHWC implementation) for verification
# ----------------------------------------------------------------------------
def reference_forward(x_nhwc, p, cfg):
    N, H, W, Cin = x_nhwc.shape
    act = (lambda y: y * jax.nn.sigmoid(y)) if cfg["non_linear"] == "Swish" \
        else (lambda y: jnp.maximum(y, 0.0))

    h = x_nhwc
    if cfg["expand"]:
        h = jnp.einsum("nhwc,cd->nhwd", h, p["w_exp"])
        h = act(h * p["exp_scale"][0] + p["exp_shift"][0])

    outs, c0 = [], 0
    for gi, k in enumerate(cfg["kernel_size"]):
        cg = cfg["split_channels"][gi]
        xg = h[..., c0:c0 + cg]
        pad = k // 2
        xp = jnp.pad(xg, ((0, 0), (pad, pad), (pad, pad), (0, 0)))
        acc = jnp.zeros_like(xg)
        for dy in range(k):
            for dx in range(k):
                acc = acc + xp[:, dy:dy + H, dx:dx + W, :] * p["w_dw"][gi][dy, dx, :]
        outs.append(acc)
        c0 += cg
    h = jnp.concatenate(outs, axis=-1)
    h = act(h * p["dw_scale"][0] + p["dw_shift"][0])

    if cfg["se"]:
        pooled = jnp.mean(h, axis=(1, 2))                            # (N, Cexp)
        r = pooled @ p["w_se1"] + p["b_se1"][0]
        r = r * jax.nn.sigmoid(r)
        s = jax.nn.sigmoid(r @ p["w_se2"] + p["b_se2"][0])
        h = h * s[:, None, None, :]

    out = jnp.einsum("nhwc,cd->nhwd", h, p["w_proj"])
    out = out * p["proj_scale"][0] + p["proj_shift"][0]
    if cfg["residual"]:
        out = out + x_nhwc
    return out


# ----------------------------------------------------------------------------
# Parameter construction
# ----------------------------------------------------------------------------
def _split_channels(channels, num_groups):
    split = [channels // num_groups for _ in range(num_groups)]
    split[0] += channels - sum(split)
    return split


def _bn_fold(gamma, beta, mean, var, eps=1e-5):
    scale = gamma / jnp.sqrt(var + eps)
    shift = beta - mean * scale
    return scale.reshape(1, -1), shift.reshape(1, -1)


def make_params(key, cfg):
    Cin, Cexp, Cout = cfg["in_channels"], cfg["expand_channels"], cfg["out_channels"]
    Cs = cfg["se_channels"]
    ks = jax.random.split(key, 24)
    n = lambda k, shape, s=0.2: s * jax.random.normal(k, shape, jnp.float32)

    def bn(k, c):
        k1, k2, k3, k4 = jax.random.split(k, 4)
        gamma = 1.0 + n(k1, (c,), 0.1)
        beta = n(k2, (c,), 0.1)
        mean = n(k3, (c,), 0.1)
        var = 1.0 + jnp.abs(n(k4, (c,), 0.1))
        return _bn_fold(gamma, beta, mean, var)

    exp_scale, exp_shift = bn(ks[0], Cexp)
    dw_scale, dw_shift = bn(ks[1], Cexp)
    proj_scale, proj_shift = bn(ks[2], Cout)

    w_dw = [n(ks[5 + i], (k, k, cg), 0.3)
            for i, (k, cg) in enumerate(zip(cfg["kernel_size"], cfg["split_channels"]))]

    return {
        "w_exp": n(ks[3], (Cin, Cexp)),
        "exp_scale": exp_scale, "exp_shift": exp_shift,
        "w_dw": w_dw,
        "dw_scale": dw_scale, "dw_shift": dw_shift,
        "w_se1": n(ks[10], (Cexp, Cs)), "b_se1": n(ks[11], (1, Cs)),
        "w_se2": n(ks[12], (Cs, Cexp)), "b_se2": n(ks[13], (1, Cexp)),
        "w_proj": n(ks[4], (Cexp, Cout)),
        "proj_scale": proj_scale, "proj_shift": proj_shift,
    }


# ----------------------------------------------------------------------------
if __name__ == "__main__":
    in_channels, out_channels = 16, 16
    kernel_size = [3, 5]
    stride = 1
    expand_ratio = 2
    se_ratio = 0.5
    expand_channels = in_channels * expand_ratio

    cfg = {
        "in_channels": in_channels,
        "out_channels": out_channels,
        "expand_channels": expand_channels,
        "kernel_size": kernel_size,
        "split_channels": _split_channels(expand_channels, len(kernel_size)),
        "expand": expand_ratio != 1,
        "se": se_ratio != 0.0,
        "se_channels": int(expand_channels * se_ratio),
        "residual": stride == 1 and in_channels == out_channels,
        "non_linear": "Swish",
    }

    key = jax.random.PRNGKey(0)
    kx, kp = jax.random.split(key)

    # PyTorch-style NCHW input (the fused kernel consumes NCHW natively).
    x_nchw = jax.random.normal(kx, (2, in_channels, 16, 16), jnp.float32)
    params = make_params(kp, cfg)

    out_nchw = jax.block_until_ready(mixnet_block_forward(x_nchw, params, cfg))

    # Verify against an independent pure-JAX f32 NHWC implementation.
    x_nhwc = jnp.transpose(x_nchw, (0, 2, 3, 1))
    ref_nhwc = jax.block_until_ready(reference_forward(x_nhwc, params, cfg))
    ref_nchw = jnp.transpose(ref_nhwc, (0, 3, 1, 2))

    # Tolerance widened slightly vs. the pure-f32 path: the expansion and
    # projection matmuls use bf16 operands (f32 accumulation) per perf review.
    np.testing.assert_allclose(np.asarray(out_nchw), np.asarray(ref_nchw),
                               rtol=2e-2, atol=2e-2)
    assert out_nchw.shape == (2, out_channels, 16, 16)
    print("KERNEL_OK")
</pallas_src>

<mosaic_0001>
module attributes {stable_mosaic.version = 11 : i64} {
  func.func @_mixnet_block_kernel(%arg0: i32, %arg1: memref<1x16x256xf32, #tpu.memory_space<vmem>>, %arg2: memref<32x16xbf16, #tpu.memory_space<vmem>>, %arg3: memref<32x1xf32, #tpu.memory_space<vmem>>, %arg4: memref<9x16x256xf32, #tpu.memory_space<vmem>>, %arg5: memref<25x16x256xf32, #tpu.memory_space<vmem>>, %arg6: memref<32x1xf32, #tpu.memory_space<vmem>>, %arg7: memref<16x32xf32, #tpu.memory_space<vmem>>, %arg8: memref<16x1xf32, #tpu.memory_space<vmem>>, %arg9: memref<32x16xf32, #tpu.memory_space<vmem>>, %arg10: memref<32x1xf32, #tpu.memory_space<vmem>>, %arg11: memref<16x32xbf16, #tpu.memory_space<vmem>>, %arg12: memref<16x1xf32, #tpu.memory_space<vmem>>, %arg13: memref<1x16x256xf32, #tpu.memory_space<vmem>>) attributes {dimension_semantics = [#tpu.dimension_semantics<parallel>], iteration_bounds = array<i64: 2>, scalar_prefetch = 0 : i64, scratch_operands = 0 : i64, tpu.core_type = #tpu.core_type<tc>, window_params = [{transform_indices = @transform_0, window_bounds = array<i64: 1, 16, 256>}, {pipeline_mode = #tpu.pipeline_mode<synchronous>, transform_indices = @transform_1, window_bounds = array<i64: 32, 16>}, {pipeline_mode = #tpu.pipeline_mode<synchronous>, transform_indices = @transform_2, window_bounds = array<i64: 32, 1>}, {pipeline_mode = #tpu.pipeline_mode<synchronous>, transform_indices = @transform_3, window_bounds = array<i64: 9, 16, 256>}, {pipeline_mode = #tpu.pipeline_mode<synchronous>, transform_indices = @transform_4, window_bounds = array<i64: 25, 16, 256>}, {pipeline_mode = #tpu.pipeline_mode<synchronous>, transform_indices = @transform_5, window_bounds = array<i64: 32, 1>}, {pipeline_mode = #tpu.pipeline_mode<synchronous>, transform_indices = @transform_6, window_bounds = array<i64: 16, 32>}, {pipeline_mode = #tpu.pipeline_mode<synchronous>, transform_indices = @transform_7, window_bounds = array<i64: 16, 1>}, {pipeline_mode = #tpu.pipeline_mode<synchronous>, transform_indices = @transform_8, window_bounds = array<i64: 32, 16>}, {pipeline_mode = #tpu.pipeline_mode<synchronous>, transform_indices = @transform_9, window_bounds = array<i64: 32, 1>}, {pipeline_mode = #tpu.pipeline_mode<synchronous>, transform_indices = @transform_10, window_bounds = array<i64: 16, 32>}, {pipeline_mode = #tpu.pipeline_mode<synchronous>, transform_indices = @transform_11, window_bounds = array<i64: 16, 1>}, {transform_indices = @transform_12, window_bounds = array<i64: 1, 16, 256>}]} {
    %c0 = arith.constant 0 : index
    %c0_0 = arith.constant 0 : index
    %c0_1 = arith.constant 0 : index
    %0 = vector.load %arg1[%c0, %c0_0, %c0_1] : memref<1x16x256xf32, #tpu.memory_space<vmem>>, vector<1x16x256xf32>
    %1 = vector.shape_cast %0 : vector<1x16x256xf32> to vector<16x256xf32>
    %c0_2 = arith.constant 0 : index
    %c0_3 = arith.constant 0 : index
    %2 = vector.load %arg2[%c0_2, %c0_3] : memref<32x16xbf16, #tpu.memory_space<vmem>>, vector<32x16xbf16>
    %3 = arith.truncf %1 : vector<16x256xf32> to vector<16x256xbf16>
    %cst = arith.constant dense<0.000000e+00> : vector<32x256xf32>
    %4 = tpu.matmul %2, %3, %cst {dimension_numbers = #tpu.dot_dimension_numbers<[1], [0], [0], [1], [0, 0, 1, 1], [], []>} : vector<32x16xbf16>, vector<16x256xbf16>, vector<32x256xf32> -> vector<32x256xf32>
    %c0_4 = arith.constant 0 : index
    %c0_5 = arith.constant 0 : index
    %5 = vector.load %arg3[%c0_4, %c0_5] : memref<32x1xf32, #tpu.memory_space<vmem>>, vector<32x1xf32>
    %6 = vector.broadcast %5 : vector<32x1xf32> to vector<32x256xf32>
    %7 = arith.addf %4, %6 : vector<32x256xf32>
    %8 = arith.negf %7 : vector<32x256xf32>
    %9 = math.exp %8 : vector<32x256xf32>
    %cst_6 = arith.constant 1.000000e+00 : f32
    %10 = vector.broadcast %cst_6 : f32 to vector<32x256xf32>
    %11 = arith.addf %10, %9 : vector<32x256xf32>
    %12 = arith.divf %10, %11 : vector<32x256xf32>
    %13 = arith.mulf %7, %12 : vector<32x256xf32>
    %14 = vector.extract_strided_slice %13 {offsets = [0, 0], sizes = [16, 256], strides = [1, 1]} : vector<32x256xf32> to vector<16x256xf32>
    %c17_i32 = arith.constant 17 : i32
    %15 = tpu.dynamic_rotate %14 by %c17_i32 dim 1 : vector<16x256xf32>, i32 -> vector<16x256xf32>
    %c0_7 = arith.constant 0 : index
    %c0_8 = arith.constant 0 : index
    %c0_9 = arith.constant 0 : index
    %16 = vector.load %arg4[%c0_7, %c0_8, %c0_9] : memref<9x16x256xf32, #tpu.memory_space<vmem>>, vector<1x16x256xf32>
    %17 = vector.shape_cast %16 : vector<1x16x256xf32> to vector<16x256xf32>
    %18 = arith.mulf %15, %17 : vector<16x256xf32>
    %c16_i32 = arith.constant 16 : i32
    %19 = tpu.dynamic_rotate %14 by %c16_i32 dim 1 : vector<16x256xf32>, i32 -> vector<16x256xf32>
    %c1 = arith.constant 1 : index
    %c0_10 = arith.constant 0 : index
    %c0_11 = arith.constant 0 : index
    %20 = vector.load %arg4[%c1, %c0_10, %c0_11] : memref<9x16x256xf32, #tpu.memory_space<vmem>>, vector<1x16x256xf32>
    %21 = vector.shape_cast %20 : vector<1x16x256xf32> to vector<16x256xf32>
    %22 = arith.mulf %19, %21 : vector<16x256xf32>
    %23 = arith.addf %18, %22 : vector<16x256xf32>
    %c15_i32 = arith.constant 15 : i32
    %24 = tpu.dynamic_rotate %14 by %c15_i32 dim 1 : vector<16x256xf32>, i32 -> vector<16x256xf32>
    %c2 = arith.constant 2 : index
    %c0_12 = arith.constant 0 : index
    %c0_13 = arith.constant 0 : index
    %25 = vector.load %arg4[%c2, %c0_12, %c0_13] : memref<9x16x256xf32, #tpu.memory_space<vmem>>, vector<1x16x256xf32>
    %26 = vector.shape_cast %25 : vector<1x16x256xf32> to vector<16x256xf32>
    %27 = arith.mulf %24, %26 : vector<16x256xf32>
    %28 = arith.addf %23, %27 : vector<16x256xf32>
    %c1_i32 = arith.constant 1 : i32
    %29 = tpu.dynamic_rotate %14 by %c1_i32 dim 1 : vector<16x256xf32>, i32 -> vector<16x256xf32>
    %c3 = arith.constant 3 : index
    %c0_14 = arith.constant 0 : index
    %c0_15 = arith.constant 0 : index
    %30 = vector.load %arg4[%c3, %c0_14, %c0_15] : memref<9x16x256xf32, #tpu.memory_space<vmem>>, vector<1x16x256xf32>
    %31 = vector.shape_cast %30 : vector<1x16x256xf32> to vector<16x256xf32>
    %32 = arith.mulf %29, %31 : vector<16x256xf32>
    %33 = arith.addf %28, %32 : vector<16x256xf32>
    %c4 = arith.constant 4 : index
    %c0_16 = arith.constant 0 : index
    %c0_17 = arith.constant 0 : index
    %34 = vector.load %arg4[%c4, %c0_16, %c0_17] : memref<9x16x256xf32, #tpu.memory_space<vmem>>, vector<1x16x256xf32>
    %35 = vector.shape_cast %34 : vector<1x16x256xf32> to vector<16x256xf32>
    %36 = arith.mulf %14, %35 : vector<16x256xf32>
    %37 = arith.addf %33, %36 : vector<16x256xf32>
    %c255_i32 = arith.constant 255 : i32
    %38 = tpu.dynamic_rotate %14 by %c255_i32 dim 1 : vector<16x256xf32>, i32 -> vector<16x256xf32>
    %c5 = arith.constant 5 : index
    %c0_18 = arith.constant 0 : index
    %c0_19 = arith.constant 0 : index
    %39 = vector.load %arg4[%c5, %c0_18, %c0_19] : memref<9x16x256xf32, #tpu.memory_space<vmem>>, vector<1x16x256xf32>
    %40 = vector.shape_cast %39 : vector<1x16x256xf32> to vector<16x256xf32>
    %41 = arith.mulf %38, %40 : vector<16x256xf32>
    %42 = arith.addf %37, %41 : vector<16x256xf32>
    %c241_i32 = arith.constant 241 : i32
    %43 = tpu.dynamic_rotate %14 by %c241_i32 dim 1 : vector<16x256xf32>, i32 -> vector<16x256xf32>
    %c6 = arith.constant 6 : index
    %c0_20 = arith.constant 0 : index
    %c0_21 = arith.constant 0 : index
    %44 = vector.load %arg4[%c6, %c0_20, %c0_21] : memref<9x16x256xf32, #tpu.memory_space<vmem>>, vector<1x16x256xf32>
    %45 = vector.shape_cast %44 : vector<1x16x256xf32> to vector<16x256xf32>
    %46 = arith.mulf %43, %45 : vector<16x256xf32>
    %47 = arith.addf %42, %46 : vector<16x256xf32>
    %c240_i32 = arith.constant 240 : i32
    %48 = tpu.dynamic_rotate %14 by %c240_i32 dim 1 : vector<16x256xf32>, i32 -> vector<16x256xf32>
    %c7 = arith.constant 7 : index
    %c0_22 = arith.constant 0 : index
    %c0_23 = arith.constant 0 : index
    %49 = vector.load %arg4[%c7, %c0_22, %c0_23] : memref<9x16x256xf32, #tpu.memory_space<vmem>>, vector<1x16x256xf32>
    %50 = vector.shape_cast %49 : vector<1x16x256xf32> to vector<16x256xf32>
    %51 = arith.mulf %48, %50 : vector<16x256xf32>
    %52 = arith.addf %47, %51 : vector<16x256xf32>
    %c239_i32 = arith.constant 239 : i32
    %53 = tpu.dynamic_rotate %14 by %c239_i32 dim 1 : vector<16x256xf32>, i32 -> vector<16x256xf32>
    %c8 = arith.constant 8 : index
    %c0_24 = arith.constant 0 : index
    %c0_25 = arith.constant 0 : index
    %54 = vector.load %arg4[%c8, %c0_24, %c0_25] : memref<9x16x256xf32, #tpu.memory_space<vmem>>, vector<1x16x256xf32>
    %55 = vector.shape_cast %54 : vector<1x16x256xf32> to vector<16x256xf32>
    %56 = arith.mulf %53, %55 : vector<16x256xf32>
    %57 = arith.addf %52, %56 : vector<16x256xf32>
    %58 = vector.extract_strided_slice %13 {offsets = [16, 0], sizes = [16, 256], strides = [1, 1]} : vector<32x256xf32> to vector<16x256xf32>
    %c34_i32 = arith.constant 34 : i32
    %59 = tpu.dynamic_rotate %58 by %c34_i32 dim 1 : vector<16x256xf32>, i32 -> vector<16x256xf32>
    %c0_26 = arith.constant 0 : index
    %c0_27 = arith.constant 0 : index
    %c0_28 = arith.constant 0 : index
    %60 = vector.load %arg5[%c0_26, %c0_27, %c0_28] : memref<25x16x256xf32, #tpu.memory_space<vmem>>, vector<1x16x256xf32>
    %61 = vector.shape_cast %60 : vector<1x16x256xf32> to vector<16x256xf32>
    %62 = arith.mulf %59, %61 : vector<16x256xf32>
    %c33_i32 = arith.constant 33 : i32
    %63 = tpu.dynamic_rotate %58 by %c33_i32 dim 1 : vector<16x256xf32>, i32 -> vector<16x256xf32>
    %c1_29 = arith.constant 1 : index
    %c0_30 = arith.constant 0 : index
    %c0_31 = arith.constant 0 : index
    %64 = vector.load %arg5[%c1_29, %c0_30, %c0_31] : memref<25x16x256xf32, #tpu.memory_space<vmem>>, vector<1x16x256xf32>
    %65 = vector.shape_cast %64 : vector<1x16x256xf32> to vector<16x256xf32>
    %66 = arith.mulf %63, %65 : vector<16x256xf32>
    %67 = arith.addf %62, %66 : vector<16x256xf32>
    %c32_i32 = arith.constant 32 : i32
    %68 = tpu.dynamic_rotate %58 by %c32_i32 dim 1 : vector<16x256xf32>, i32 -> vector<16x256xf32>
    %c2_32 = arith.constant 2 : index
    %c0_33 = arith.constant 0 : index
    %c0_34 = arith.constant 0 : index
    %69 = vector.load %arg5[%c2_32, %c0_33, %c0_34] : memref<25x16x256xf32, #tpu.memory_space<vmem>>, vector<1x16x256xf32>
    %70 = vector.shape_cast %69 : vector<1x16x256xf32> to vector<16x256xf32>
    %71 = arith.mulf %68, %70 : vector<16x256xf32>
    %72 = arith.addf %67, %71 : vector<16x256xf32>
    %c31_i32 = arith.constant 31 : i32
    %73 = tpu.dynamic_rotate %58 by %c31_i32 dim 1 : vector<16x256xf32>, i32 -> vector<16x256xf32>
    %c3_35 = arith.constant 3 : index
    %c0_36 = arith.constant 0 : index
    %c0_37 = arith.constant 0 : index
    %74 = vector.load %arg5[%c3_35, %c0_36, %c0_37] : memref<25x16x256xf32, #tpu.memory_space<vmem>>, vector<1x16x256xf32>
    %75 = vector.shape_cast %74 : vector<1x16x256xf32> to vector<16x256xf32>
    %76 = arith.mulf %73, %75 : vector<16x256xf32>
    %77 = arith.addf %72, %76 : vector<16x256xf32>
    %c30_i32 = arith.constant 30 : i32
    %78 = tpu.dynamic_rotate %58 by %c30_i32 dim 1 : vector<16x256xf32>, i32 -> vector<16x256xf32>
    %c4_38 = arith.constant 4 : index
    %c0_39 = arith.constant 0 : index
    %c0_40 = arith.constant 0 : index
    %79 = vector.load %arg5[%c4_38, %c0_39, %c0_40] : memref<25x16x256xf32, #tpu.memory_space<vmem>>, vector<1x16x256xf32>
    %80 = vector.shape_cast %79 : vector<1x16x256xf32> to vector<16x256xf32>
    %81 = arith.mulf %78, %80 : vector<16x256xf32>
    %82 = arith.addf %77, %81 : vector<16x256xf32>
    %c18_i32 = arith.constant 18 : i32
    %83 = tpu.dynamic_rotate %58 by %c18_i32 dim 1 : vector<16x256xf32>, i32 -> vector<16x256xf32>
    %c5_41 = arith.constant 5 : index
    %c0_42 = arith.constant 0 : index
    %c0_43 = arith.constant 0 : index
    %84 = vector.load %arg5[%c5_41, %c0_42, %c0_43] : memref<25x16x256xf32, #tpu.memory_space<vmem>>, vector<1x16x256xf32>
    %85 = vector.shape_cast %84 : vector<1x16x256xf32> to vector<16x256xf32>
    %86 = arith.mulf %83, %85 : vector<16x256xf32>
    %87 = arith.addf %82, %86 : vector<16x256xf32>
    %c17_i32_44 = arith.constant 17 : i32
    %88 = tpu.dynamic_rotate %58 by %c17_i32_44 dim 1 : vector<16x256xf32>, i32 -> vector<16x256xf32>
    %c6_45 = arith.constant 6 : index
    %c0_46 = arith.constant 0 : index
    %c0_47 = arith.constant 0 : index
    %89 = vector.load %arg5[%c6_45, %c0_46, %c0_47] : memref<25x16x256xf32, #tpu.memory_space<vmem>>, vector<1x16x256xf32>
    %90 = vector.shape_cast %89 : vector<1x16x256xf32> to vector<16x256xf32>
    %91 = arith.mulf %88, %90 : vector<16x256xf32>
    %92 = arith.addf %87, %91 : vector<16x256xf32>
    %c16_i32_48 = arith.constant 16 : i32
    %93 = tpu.dynamic_rotate %58 by %c16_i32_48 dim 1 : vector<16x256xf32>, i32 -> vector<16x256xf32>
    %c7_49 = arith.constant 7 : index
    %c0_50 = arith.constant 0 : index
    %c0_51 = arith.constant 0 : index
    %94 = vector.load %arg5[%c7_49, %c0_50, %c0_51] : memref<25x16x256xf32, #tpu.memory_space<vmem>>, vector<1x16x256xf32>
    %95 = vector.shape_cast %94 : vector<1x16x256xf32> to vector<16x256xf32>
    %96 = arith.mulf %93, %95 : vector<16x256xf32>
    %97 = arith.addf %92, %96 : vector<16x256xf32>
    %c15_i32_52 = arith.constant 15 : i32
    %98 = tpu.dynamic_rotate %58 by %c15_i32_52 dim 1 : vector<16x256xf32>, i32 -> vector<16x256xf32>
    %c8_53 = arith.constant 8 : index
    %c0_54 = arith.constant 0 : index
    %c0_55 = arith.constant 0 : index
    %99 = vector.load %arg5[%c8_53, %c0_54, %c0_55] : memref<25x16x256xf32, #tpu.memory_space<vmem>>, vector<1x16x256xf32>
    %100 = vector.shape_cast %99 : vector<1x16x256xf32> to vector<16x256xf32>
    %101 = arith.mulf %98, %100 : vector<16x256xf32>
    %102 = arith.addf %97, %101 : vector<16x256xf32>
    %c14_i32 = arith.constant 14 : i32
    %103 = tpu.dynamic_rotate %58 by %c14_i32 dim 1 : vector<16x256xf32>, i32 -> vector<16x256xf32>
    %c9 = arith.constant 9 : index
    %c0_56 = arith.constant 0 : index
    %c0_57 = arith.constant 0 : index
    %104 = vector.load %arg5[%c9, %c0_56, %c0_57] : memref<25x16x256xf32, #tpu.memory_space<vmem>>, vector<1x16x256xf32>
    %105 = vector.shape_cast %104 : vector<1x16x256xf32> to vector<16x256xf32>
    %106 = arith.mulf %103, %105 : vector<16x256xf32>
    %107 = arith.addf %102, %106 : vector<16x256xf32>
    %c2_i32 = arith.constant 2 : i32
    %108 = tpu.dynamic_rotate %58 by %c2_i32 dim 1 : vector<16x256xf32>, i32 -> vector<16x256xf32>
    %c10 = arith.constant 10 : index
    %c0_58 = arith.constant 0 : index
    %c0_59 = arith.constant 0 : index
    %109 = vector.load %arg5[%c10, %c0_58, %c0_59] : memref<25x16x256xf32, #tpu.memory_space<vmem>>, vector<1x16x256xf32>
    %110 = vector.shape_cast %109 : vector<1x16x256xf32> to vector<16x256xf32>
    %111 = arith.mulf %108, %110 : vector<16x256xf32>
    %112 = arith.addf %107, %111 : vector<16x256xf32>
    %c1_i32_60 = arith.constant 1 : i32
    %113 = tpu.dynamic_rotate %58 by %c1_i32_60 dim 1 : vector<16x256xf32>, i32 -> vector<16x256xf32>
    %c11 = arith.constant 11 : index
    %c0_61 = arith.constant 0 : index
    %c0_62 = arith.constant 0 : index
    %114 = vector.load %arg5[%c11, %c0_61, %c0_62] : memref<25x16x256xf32, #tpu.memory_space<vmem>>, vector<1x16x256xf32>
    %115 = vector.shape_cast %114 : vector<1x16x256xf32> to vector<16x256xf32>
    %116 = arith.mulf %113, %115 : vector<16x256xf32>
    %117 = arith.addf %112, %116 : vector<16x256xf32>
    %c12 = arith.constant 12 : index
    %c0_63 = arith.constant 0 : index
    %c0_64 = arith.constant 0 : index
    %118 = vector.load %arg5[%c12, %c0_63, %c0_64] : memref<25x16x256xf32, #tpu.memory_space<vmem>>, vector<1x16x256xf32>
    %119 = vector.shape_cast %118 : vector<1x16x256xf32> to vector<16x256xf32>
    %120 = arith.mulf %58, %119 : vector<16x256xf32>
    %121 = arith.addf %117, %120 : vector<16x256xf32>
    %c255_i32_65 = arith.constant 255 : i32
    %122 = tpu.dynamic_rotate %58 by %c255_i32_65 dim 1 : vector<16x256xf32>, i32 -> vector<16x256xf32>
    %c13 = arith.constant 13 : index
    %c0_66 = arith.constant 0 : index
    %c0_67 = arith.constant 0 : index
    %123 = vector.load %arg5[%c13, %c0_66, %c0_67] : memref<25x16x256xf32, #tpu.memory_space<vmem>>, vector<1x16x256xf32>
    %124 = vector.shape_cast %123 : vector<1x16x256xf32> to vector<16x256xf32>
    %125 = arith.mulf %122, %124 : vector<16x256xf32>
    %126 = arith.addf %121, %125 : vector<16x256xf32>
    %c254_i32 = arith.constant 254 : i32
    %127 = tpu.dynamic_rotate %58 by %c254_i32 dim 1 : vector<16x256xf32>, i32 -> vector<16x256xf32>
    %c14 = arith.constant 14 : index
    %c0_68 = arith.constant 0 : index
    %c0_69 = arith.constant 0 : index
    %128 = vector.load %arg5[%c14, %c0_68, %c0_69] : memref<25x16x256xf32, #tpu.memory_space<vmem>>, vector<1x16x256xf32>
    %129 = vector.shape_cast %128 : vector<1x16x256xf32> to vector<16x256xf32>
    %130 = arith.mulf %127, %129 : vector<16x256xf32>
    %131 = arith.addf %126, %130 : vector<16x256xf32>
    %c242_i32 = arith.constant 242 : i32
    %132 = tpu.dynamic_rotate %58 by %c242_i32 dim 1 : vector<16x256xf32>, i32 -> vector<16x256xf32>
    %c15 = arith.constant 15 : index
    %c0_70 = arith.constant 0 : index
    %c0_71 = arith.constant 0 : index
    %133 = vector.load %arg5[%c15, %c0_70, %c0_71] : memref<25x16x256xf32, #tpu.memory_space<vmem>>, vector<1x16x256xf32>
    %134 = vector.shape_cast %133 : vector<1x16x256xf32> to vector<16x256xf32>
    %135 = arith.mulf %132, %134 : vector<16x256xf32>
    %136 = arith.addf %131, %135 : vector<16x256xf32>
    %c241_i32_72 = arith.constant 241 : i32
    %137 = tpu.dynamic_rotate %58 by %c241_i32_72 dim 1 : vector<16x256xf32>, i32 -> vector<16x256xf32>
    %c16 = arith.constant 16 : index
    %c0_73 = arith.constant 0 : index
    %c0_74 = arith.constant 0 : index
    %138 = vector.load %arg5[%c16, %c0_73, %c0_74] : memref<25x16x256xf32, #tpu.memory_space<vmem>>, vector<1x16x256xf32>
    %139 = vector.shape_cast %138 : vector<1x16x256xf32> to vector<16x256xf32>
    %140 = arith.mulf %137, %139 : vector<16x256xf32>
    %141 = arith.addf %136, %140 : vector<16x256xf32>
    %c240_i32_75 = arith.constant 240 : i32
    %142 = tpu.dynamic_rotate %58 by %c240_i32_75 dim 1 : vector<16x256xf32>, i32 -> vector<16x256xf32>
    %c17 = arith.constant 17 : index
    %c0_76 = arith.constant 0 : index
    %c0_77 = arith.constant 0 : index
    %143 = vector.load %arg5[%c17, %c0_76, %c0_77] : memref<25x16x256xf32, #tpu.memory_space<vmem>>, vector<1x16x256xf32>
    %144 = vector.shape_cast %143 : vector<1x16x256xf32> to vector<16x256xf32>
    %145 = arith.mulf %142, %144 : vector<16x256xf32>
    %146 = arith.addf %141, %145 : vector<16x256xf32>
    %c239_i32_78 = arith.constant 239 : i32
    %147 = tpu.dynamic_rotate %58 by %c239_i32_78 dim 1 : vector<16x256xf32>, i32 -> vector<16x256xf32>
    %c18 = arith.constant 18 : index
    %c0_79 = arith.constant 0 : index
    %c0_80 = arith.constant 0 : index
    %148 = vector.load %arg5[%c18, %c0_79, %c0_80] : memref<25x16x256xf32, #tpu.memory_space<vmem>>, vector<1x16x256xf32>
    %149 = vector.shape_cast %148 : vector<1x16x256xf32> to vector<16x256xf32>
    %150 = arith.mulf %147, %149 : vector<16x256xf32>
    %151 = arith.addf %146, %150 : vector<16x256xf32>
    %c238_i32 = arith.constant 238 : i32
    %152 = tpu.dynamic_rotate %58 by %c238_i32 dim 1 : vector<16x256xf32>, i32 -> vector<16x256xf32>
    %c19 = arith.constant 19 : index
    %c0_81 = arith.constant 0 : index
    %c0_82 = arith.constant 0 : index
    %153 = vector.load %arg5[%c19, %c0_81, %c0_82] : memref<25x16x256xf32, #tpu.memory_space<vmem>>, vector<1x16x256xf32>
    %154 = vector.shape_cast %153 : vector<1x16x256xf32> to vector<16x256xf32>
    %155 = arith.mulf %152, %154 : vector<16x256xf32>
    %156 = arith.addf %151, %155 : vector<16x256xf32>
    %c226_i32 = arith.constant 226 : i32
    %157 = tpu.dynamic_rotate %58 by %c226_i32 dim 1 : vector<16x256xf32>, i32 -> vector<16x256xf32>
    %c20 = arith.constant 20 : index
    %c0_83 = arith.constant 0 : index
    %c0_84 = arith.constant 0 : index
    %158 = vector.load %arg5[%c20, %c0_83, %c0_84] : memref<25x16x256xf32, #tpu.memory_space<vmem>>, vector<1x16x256xf32>
    %159 = vector.shape_cast %158 : vector<1x16x256xf32> to vector<16x256xf32>
    %160 = arith.mulf %157, %159 : vector<16x256xf32>
    %161 = arith.addf %156, %160 : vector<16x256xf32>
    %c225_i32 = arith.constant 225 : i32
    %162 = tpu.dynamic_rotate %58 by %c225_i32 dim 1 : vector<16x256xf32>, i32 -> vector<16x256xf32>
    %c21 = arith.constant 21 : index
    %c0_85 = arith.constant 0 : index
    %c0_86 = arith.constant 0 : index
    %163 = vector.load %arg5[%c21, %c0_85, %c0_86] : memref<25x16x256xf32, #tpu.memory_space<vmem>>, vector<1x16x256xf32>
    %164 = vector.shape_cast %163 : vector<1x16x256xf32> to vector<16x256xf32>
    %165 = arith.mulf %162, %164 : vector<16x256xf32>
    %166 = arith.addf %161, %165 : vector<16x256xf32>
    %c224_i32 = arith.constant 224 : i32
    %167 = tpu.dynamic_rotate %58 by %c224_i32 dim 1 : vector<16x256xf32>, i32 -> vector<16x256xf32>
    %c22 = arith.constant 22 : index
    %c0_87 = arith.constant 0 : index
    %c0_88 = arith.constant 0 : index
    %168 = vector.load %arg5[%c22, %c0_87, %c0_88] : memref<25x16x256xf32, #tpu.memory_space<vmem>>, vector<1x16x256xf32>
    %169 = vector.shape_cast %168 : vector<1x16x256xf32> to vector<16x256xf32>
    %170 = arith.mulf %167, %169 : vector<16x256xf32>
    %171 = arith.addf %166, %170 : vector<16x256xf32>
    %c223_i32 = arith.constant 223 : i32
    %172 = tpu.dynamic_rotate %58 by %c223_i32 dim 1 : vector<16x256xf32>, i32 -> vector<16x256xf32>
    %c23 = arith.constant 23 : index
    %c0_89 = arith.constant 0 : index
    %c0_90 = arith.constant 0 : index
    %173 = vector.load %arg5[%c23, %c0_89, %c0_90] : memref<25x16x256xf32, #tpu.memory_space<vmem>>, vector<1x16x256xf32>
    %174 = vector.shape_cast %173 : vector<1x16x256xf32> to vector<16x256xf32>
    %175 = arith.mulf %172, %174 : vector<16x256xf32>
    %176 = arith.addf %171, %175 : vector<16x256xf32>
    %c222_i32 = arith.constant 222 : i32
    %177 = tpu.dynamic_rotate %58 by %c222_i32 dim 1 : vector<16x256xf32>, i32 -> vector<16x256xf32>
    %c24 = arith.constant 24 : index
    %c0_91 = arith.constant 0 : index
    %c0_92 = arith.constant 0 : index
    %178 = vector.load %arg5[%c24, %c0_91, %c0_92] : memref<25x16x256xf32, #tpu.memory_space<vmem>>, vector<1x16x256xf32>
    %179 = vector.shape_cast %178 : vector<1x16x256xf32> to vector<16x256xf32>
    %180 = arith.mulf %177, %179 : vector<16x256xf32>
    %181 = arith.addf %176, %180 : vector<16x256xf32>
    %182 = tpu.concatenate %57, %181 in 0 : vector<16x256xf32>, vector<16x256xf32> -> vector<32x256xf32>
    %c0_93 = arith.constant 0 : index
    %c0_94 = arith.constant 0 : index
    %183 = vector.load %arg6[%c0_93, %c0_94] : memref<32x1xf32, #tpu.memory_space<vmem>>, vector<32x1xf32>
    %184 = vector.broadcast %183 : vector<32x1xf32> to vector<32x256xf32>
    %185 = arith.addf %182, %184 : vector<32x256xf32>
    %186 = arith.negf %185 : vector<32x256xf32>
    %187 = math.exp %186 : vector<32x256xf32>
    %cst_95 = arith.constant 1.000000e+00 : f32
    %188 = vector.broadcast %cst_95 : f32 to vector<32x256xf32>
    %189 = arith.addf %188, %187 : vector<32x256xf32>
    %190 = arith.divf %188, %189 : vector<32x256xf32>
    %191 = arith.mulf %185, %190 : vector<32x256xf32>
    %cst_96 = arith.constant dense<0.000000e+00> : vector<32xf32>
    %192 = vector.multi_reduction <add>, %191, %cst_96 [1] : vector<32x256xf32> to vector<32xf32>
    %193 = vector.shape_cast %192 : vector<32xf32> to vector<32x1xf32>
    %cst_97 = arith.constant 2.560000e+02 : f32
    %194 = vector.broadcast %cst_97 : f32 to vector<32x1xf32>
    %195 = arith.divf %193, %194 : vector<32x1xf32>
    %c0_98 = arith.constant 0 : index
    %c0_99 = arith.constant 0 : index
    %196 = vector.load %arg7[%c0_98, %c0_99] : memref<16x32xf32, #tpu.memory_space<vmem>>, vector<16x32xf32>
    %cst_100 = arith.constant dense<0.000000e+00> : vector<16x1xf32>
    %197 = tpu.matmul %196, %195, %cst_100 {dimension_numbers = #tpu.dot_dimension_numbers<[1], [0], [0], [1], [0, 0, 1, 1], [], []>} : vector<16x32xf32>, vector<32x1xf32>, vector<16x1xf32> -> vector<16x1xf32>
    %c0_101 = arith.constant 0 : index
    %c0_102 = arith.constant 0 : index
    %198 = vector.load %arg8[%c0_101, %c0_102] : memref<16x1xf32, #tpu.memory_space<vmem>>, vector<16x1xf32>
    %199 = arith.addf %197, %198 : vector<16x1xf32>
    %200 = arith.negf %199 : vector<16x1xf32>
    %201 = math.exp %200 : vector<16x1xf32>
    %cst_103 = arith.constant 1.000000e+00 : f32
    %202 = vector.broadcast %cst_103 : f32 to vector<16x1xf32>
    %203 = arith.addf %202, %201 : vector<16x1xf32>
    %204 = arith.divf %202, %203 : vector<16x1xf32>
    %205 = arith.mulf %199, %204 : vector<16x1xf32>
    %c0_104 = arith.constant 0 : index
    %c0_105 = arith.constant 0 : index
    %206 = vector.load %arg9[%c0_104, %c0_105] : memref<32x16xf32, #tpu.memory_space<vmem>>, vector<32x16xf32>
    %cst_106 = arith.constant dense<0.000000e+00> : vector<32x1xf32>
    %207 = tpu.matmul %206, %205, %cst_106 {dimension_numbers = #tpu.dot_dimension_numbers<[1], [0], [0], [1], [0, 0, 1, 1], [], []>} : vector<32x16xf32>, vector<16x1xf32>, vector<32x1xf32> -> vector<32x1xf32>
    %c0_107 = arith.constant 0 : index
    %c0_108 = arith.constant 0 : index
    %208 = vector.load %arg10[%c0_107, %c0_108] : memref<32x1xf32, #tpu.memory_space<vmem>>, vector<32x1xf32>
    %209 = arith.addf %207, %208 : vector<32x1xf32>
    %210 = arith.negf %209 : vector<32x1xf32>
    %211 = math.exp %210 : vector<32x1xf32>
    %cst_109 = arith.constant 1.000000e+00 : f32
    %212 = vector.broadcast %cst_109 : f32 to vector<32x1xf32>
    %213 = arith.addf %212, %211 : vector<32x1xf32>
    %214 = arith.divf %212, %213 : vector<32x1xf32>
    %215 = vector.broadcast %214 : vector<32x1xf32> to vector<32x256xf32>
    %216 = arith.mulf %191, %215 : vector<32x256xf32>
    %c0_110 = arith.constant 0 : index
    %c0_111 = arith.constant 0 : index
    %217 = vector.load %arg11[%c0_110, %c0_111] : memref<16x32xbf16, #tpu.memory_space<vmem>>, vector<16x32xbf16>
    %218 = arith.truncf %216 : vector<32x256xf32> to vector<32x256xbf16>
    %cst_112 = arith.constant dense<0.000000e+00> : vector<16x256xf32>
    %219 = tpu.matmul %217, %218, %cst_112 {dimension_numbers = #tpu.dot_dimension_numbers<[1], [0], [0], [1], [0, 0, 1, 1], [], []>} : vector<16x32xbf16>, vector<32x256xbf16>, vector<16x256xf32> -> vector<16x256xf32>
    %c0_113 = arith.constant 0 : index
    %c0_114 = arith.constant 0 : index
    %220 = vector.load %arg12[%c0_113, %c0_114] : memref<16x1xf32, #tpu.memory_space<vmem>>, vector<16x1xf32>
    %221 = vector.broadcast %220 : vector<16x1xf32> to vector<16x256xf32>
    %222 = arith.addf %219, %221 : vector<16x256xf32>
    %223 = arith.addf %222, %1 : vector<16x256xf32>
    %c0_115 = arith.constant 0 : index
    %c0_116 = arith.constant 0 : index
    %c0_117 = arith.constant 0 : index
    %224 = vector.load %arg13[%c0_115, %c0_116, %c0_117] : memref<1x16x256xf32, #tpu.memory_space<vmem>>, vector<1x16x256xf32>
    %225 = vector.shape_cast %224 : vector<1x16x256xf32> to vector<16x256xf32>
    %226 = vector.shape_cast %223 : vector<16x256xf32> to vector<1x16x256xf32>
    tpu.vector_store %arg13[%c0_115, %c0_116, %c0_117], %226 {strides = array<i32>} : memref<1x16x256xf32, #tpu.memory_space<vmem>>, vector<1x16x256xf32>,
    return
  }
  func.func @transform_0(%arg0: i32) -> (i32, i32, i32) {
    %c0_i32 = arith.constant 0 : i32
    %c0_i32_0 = arith.constant 0 : i32
    %c0_i32_1 = arith.constant 0 : i32
    return %arg0, %c0_i32, %c0_i32_0 : i32, i32, i32
  }
  func.func @transform_1(%arg0: i32) -> (i32, i32) {
    %c0_i32 = arith.constant 0 : i32
    %c0_i32_0 = arith.constant 0 : i32
    %c0_i32_1 = arith.constant 0 : i32
    return %c0_i32, %c0_i32_0 : i32, i32
  }
  func.func @transform_2(%arg0: i32) -> (i32, i32) {
    %c0_i32 = arith.constant 0 : i32
    %c0_i32_0 = arith.constant 0 : i32
    %c0_i32_1 = arith.constant 0 : i32
    return %c0_i32, %c0_i32_0 : i32, i32
  }
  func.func @transform_3(%arg0: i32) -> (i32, i32, i32) {
    %c0_i32 = arith.constant 0 : i32
    %c0_i32_0 = arith.constant 0 : i32
    %c0_i32_1 = arith.constant 0 : i32
    %c0_i32_2 = arith.constant 0 : i32
    return %c0_i32, %c0_i32_0, %c0_i32_1 : i32, i32, i32
  }
  func.func @transform_4(%arg0: i32) -> (i32, i32, i32) {
    %c0_i32 = arith.constant 0 : i32
    %c0_i32_0 = arith.constant 0 : i32
    %c0_i32_1 = arith.constant 0 : i32
    %c0_i32_2 = arith.constant 0 : i32
    return %c0_i32, %c0_i32_0, %c0_i32_1 : i32, i32, i32
  }
  func.func @transform_5(%arg0: i32) -> (i32, i32) {
    %c0_i32 = arith.constant 0 : i32
    %c0_i32_0 = arith.constant 0 : i32
    %c0_i32_1 = arith.constant 0 : i32
    return %c0_i32, %c0_i32_0 : i32, i32
  }
  func.func @transform_6(%arg0: i32) -> (i32, i32) {
    %c0_i32 = arith.constant 0 : i32
    %c0_i32_0 = arith.constant 0 : i32
    %c0_i32_1 = arith.constant 0 : i32
    return %c0_i32, %c0_i32_0 : i32, i32
  }
  func.func @transform_7(%arg0: i32) -> (i32, i32) {
    %c0_i32 = arith.constant 0 : i32
    %c0_i32_0 = arith.constant 0 : i32
    %c0_i32_1 = arith.constant 0 : i32
    return %c0_i32, %c0_i32_0 : i32, i32
  }
  func.func @transform_8(%arg0: i32) -> (i32, i32) {
    %c0_i32 = arith.constant 0 : i32
    %c0_i32_0 = arith.constant 0 : i32
    %c0_i32_1 = arith.constant 0 : i32
    return %c0_i32, %c0_i32_0 : i32, i32
  }
  func.func @transform_9(%arg0: i32) -> (i32, i32) {
    %c0_i32 = arith.constant 0 : i32
    %c0_i32_0 = arith.constant 0 : i32
    %c0_i32_1 = arith.constant 0 : i32
    return %c0_i32, %c0_i32_0 : i32, i32
  }
  func.func @transform_10(%arg0: i32) -> (i32, i32) {
    %c0_i32 = arith.constant 0 : i32
    %c0_i32_0 = arith.constant 0 : i32
    %c0_i32_1 = arith.constant 0 : i32
    return %c0_i32, %c0_i32_0 : i32, i32
  }
  func.func @transform_11(%arg0: i32) -> (i32, i32) {
    %c0_i32 = arith.constant 0 : i32
    %c0_i32_0 = arith.constant 0 : i32
    %c0_i32_1 = arith.constant 0 : i32
    return %c0_i32, %c0_i32_0 : i32, i32
  }
  func.func @transform_12(%arg0: i32) -> (i32, i32, i32) {
    %c0_i32 = arith.constant 0 : i32
    %c0_i32_0 = arith.constant 0 : i32
    %c0_i32_1 = arith.constant 0 : i32
    return %arg0, %c0_i32, %c0_i32_0 : i32, i32, i32
  }
}

</mosaic_0001>

<llo_original>
// kernel: tpu_custom_call.1
$region0: #{tpu_custom_call.1}
  #allocation0 [shape = 'u32[]', space=smem, size = 0x4, offset = 0x4, fixed_abs, tag = 'smem constant byte address 0x4 - core index']
  #allocation1 [shape = 'u32[144,128]{1,0:T(1,128)}', space=vmem, size = 0x12000, scoped, tag = 'internal scratch']
  %s0 = inlined_call_operand.vmem [shape: f32[2,16,256], index: 0, kind: input, shape index: {}]
  %s1 = inlined_call_operand.vmem [shape: bf16[32,16], index: 1, kind: input, shape index: {}]
  %s2 = inlined_call_operand.vmem [shape: f32[32,1], index: 2, kind: input, shape index: {}]
  %s3 = inlined_call_operand.hbm [shape: f32[9,16,256], index: 3, kind: input, shape index: {}]
  %s4 = inlined_call_operand.hbm [shape: f32[25,16,256], index: 4, kind: input, shape index: {}]
  %s5 = inlined_call_operand.vmem [shape: f32[32,1], index: 5, kind: input, shape index: {}]
  %s6 = inlined_call_operand.vmem [shape: f32[16,32], index: 6, kind: input, shape index: {}]
  %s7 = inlined_call_operand.vmem [shape: f32[16,1], index: 7, kind: input, shape index: {}]
  %s8 = inlined_call_operand.vmem [shape: f32[32,16], index: 8, kind: input, shape index: {}]
  %s9 = inlined_call_operand.vmem [shape: f32[32,1], index: 9, kind: input, shape index: {}]
  %s10 = inlined_call_operand.vmem [shape: bf16[16,32], index: 10, kind: input, shape index: {}]
  %s11 = inlined_call_operand.vmem [shape: f32[16,1], index: 11, kind: input, shape index: {}]
  %s12 = inlined_call_operand.hbm [shape: f32[2,16,256], index: 12, kind: output, shape index: {}]
  %s13 = sld [smem:[#allocation0]]
  $region89: #{tpu_custom_call.1} parent=0
    _
  %s15 = ssub.s32 1, %s13
  %s16 = scalar_select 0, %s15, %s13
  $region1: #{tpu_custom_call.1} parent=0
    #allocation2 [shape = 'u8[147456]{0}', space=vmem, size = 0x24000, scoped, tag = 'input window, operand 3, single buffered']
    #allocation3 [shape = 's32[2]{0}', space=sflag, size = 0x8, scoped, tag = 'scoped memory for tpu_custom_call.1']
    #allocation4 [shape = 's32[2]{0}', space=sflag, size = 0x8, scoped, tag = 'scoped memory for tpu_custom_call.1']
    #allocation5 [shape = 'u8[409600]{0}', space=vmem, size = 0x64000, scoped, tag = 'input window, operand 4, single buffered']
    #allocation6 [shape = 's32[1]{0}', space=sflag, size = 0x4, scoped, tag = 'scoped memory for tpu_custom_call.1']
    #allocation7 [shape = 'u8[32768]{0}', space=vmem, size = 0x8000, scoped, tag = 'output window, operand 0']
    %17 = vsyncpa [#allocation3], 0
    %18 = vsyncpa [#allocation6], 0
    %19 = vsyncpa [#allocation4], 0
    %s20 = scalar_lea.sflag [#allocation4], 1
    %21 = vsyncpa %s20, 0
    loop: start=0, step=1, limit=4
    $region2: #{tpu_custom_call.1} parent=1 // loop_pre_header
      _
    $region3: #{tpu_custom_call.1} parent=1 // loop_header
      %s23 = sphi 0, %s27
      %p24 = scmp.ge.s32.totalorder %s23, 4
      %s33 = sphi 0, %s35
      %s36 = sphi 0, %s33
      %s37 = sphi 0, %s36
      %s53 = sphi 0, %s37
      %s57 = sphi 0, %s57
      %s59 = sphi 0, %s57
      %s60 = sphi 0, %s59
      %s74 = sphi 0, %s60
      %s78 = sphi 0, %s78
      %s80 = sphi 0, %s78
      %s81 = sphi 0, %s80
      %s95 = sphi 0, %s81
      %s99 = sphi 0, %s99
      %s101 = sphi 0, %s99
      %s102 = sphi 0, %s101
      %s116 = sphi 0, %s102
      %s120 = sphi 0, %s120
      %s122 = sphi 0, %s120
      %s123 = sphi 0, %s122
      %s137 = sphi 0, %s123
      %s141 = sphi 0, %s141
      %s143 = sphi 0, %s141
      %s144 = sphi 0, %s143
      %s158 = sphi 0, %s144
      %s162 = sphi 0, %s162
      %s164 = sphi 0, %s162
      %s165 = sphi 0, %s164
      %s179 = sphi 0, %s165
      %s183 = sphi 0, %s183
      %s185 = sphi 0, %s183
      %s186 = sphi 0, %s185
      %s200 = sphi 0, %s186
      %s204 = sphi 0, %s204
      %s206 = sphi 0, %s204
      %s207 = sphi 0, %s206
      %s221 = sphi 0, %s207
      %s225 = sphi 0, %s225
      %s227 = sphi 0, %s225
      %s228 = sphi 0, %s227
      %s242 = sphi 0, %s228
      %s246 = sphi 0, %s246
      %s248 = sphi 0, %s246
      %s249 = sphi 0, %s248
      %s263 = sphi 0, %s249
      %s267 = sphi 0, %s267
      %s269 = sphi 0, %s267
      %s270 = sphi 0, %s269
      %s284 = sphi 0, %s270
      %s290 = sphi 0, %s292
      %s293 = sphi 0, %s290
      %s294 = sphi 0, %s293
      %s310 = sphi 0, %s294
    $region4: #{tpu_custom_call.1} parent=1 // loop_header_branch
      %26 = sbr.rel (%p24) target = $region8
    $region5: #{tpu_custom_call.1} parent=1 // loop_body
      %s28 = ssub.s32 %s23, 1
      %s29 = ssub.s32 %s23, 2
      %s30 = sadd.s32 %s23, 1
      %s31 = ssub.s32 %s23, %s30
      %p32 = scmp.eq.s32.totalorder %s31, 0
      %s34 = sadd.s32 %s33, 1
      %s35 = scalar_select %p32, %s33, %s34
      %p38 = pneg %p32
      %p39 = scmp.eq.s32.totalorder %s23, 1
      %p40 = por %p38, %p39
      %p41 = scmp.ne.s32.totalorder %s33, %s36
      %p42 = scmp.eq.s32.totalorder %s23, 0
      %p43 = por %p41, %p42
      %p44 = scmp.ne.s32.totalorder %s33, %s36
      %p45 = scmp.eq.s32.totalorder %s28, 1
      %p46 = por %p44, %p45
      %p47 = scmp.ne.s32.totalorder %s36, %s37
      %p48 = scmp.eq.s32.totalorder %s28, 0
      %p49 = por %p47, %p48
      %p50 = scmp.ne.s32.totalorder %s36, %s37
      %p51 = scmp.eq.s32.totalorder %s29, 1
      %p52 = por %p50, %p51
      %p54 = scmp.ne.s32.totalorder %s37, %s53
      %p55 = scmp.eq.s32.totalorder %s29, 0
      %p56 = por %p54, %p55
      %s58 = sadd.s32 %s57, 1
      %p61 = scmp.eq.s32.totalorder %s23, 1
      %p62 = scmp.ne.s32.totalorder %s57, %s59
      %p63 = scmp.eq.s32.totalorder %s23, 0
      %p64 = por %p62, %p63
      %p65 = scmp.ne.s32.totalorder %s57, %s59
      %p66 = scmp.eq.s32.totalorder %s28, 1
      %p67 = por %p65, %p66
      %p68 = scmp.ne.s32.totalorder %s59, %s60
      %p69 = scmp.eq.s32.totalorder %s28, 0
      %p70 = por %p68, %p69
      %p71 = scmp.ne.s32.totalorder %s59, %s60
      %p72 = scmp.eq.s32.totalorder %s29, 1
      %p73 = por %p71, %p72
      %p75 = scmp.ne.s32.totalorder %s60, %s74
      %p76 = scmp.eq.s32.totalorder %s29, 0
      %p77 = por %p75, %p76
      %s79 = sadd.s32 %s78, 1
      %p82 = scmp.eq.s32.totalorder %s23, 1
      %p83 = scmp.ne.s32.totalorder %s78, %s80
      %p84 = scmp.eq.s32.totalorder %s23, 0
      %p85 = por %p83, %p84
      %p86 = scmp.ne.s32.totalorder %s78, %s80
      %p87 = scmp.eq.s32.totalorder %s28, 1
      %p88 = por %p86, %p87
      %p89 = scmp.ne.s32.totalorder %s80, %s81
      %p90 = scmp.eq.s32.totalorder %s28, 0
      %p91 = por %p89, %p90
      %p92 = scmp.ne.s32.totalorder %s80, %s81
      %p93 = scmp.eq.s32.totalorder %s29, 1
      %p94 = por %p92, %p93
      %p96 = scmp.ne.s32.totalorder %s81, %s95
      %p97 = scmp.eq.s32.totalorder %s29, 0
      %p98 = por %p96, %p97
      %s100 = sadd.s32 %s99, 1
      %p103 = scmp.eq.s32.totalorder %s23, 1
      %p104 = scmp.ne.s32.totalorder %s99, %s101
      %p105 = scmp.eq.s32.totalorder %s23, 0
      %p106 = por %p104, %p105
      %p107 = scmp.ne.s32.totalorder %s99, %s101
      %p108 = scmp.eq.s32.totalorder %s28, 1
      %p109 = por %p107, %p108
      %p110 = scmp.ne.s32.totalorder %s101, %s102
      %p111 = scmp.eq.s32.totalorder %s28, 0
      %p112 = por %p110, %p111
      %p113 = scmp.ne.s32.totalorder %s101, %s102
      %p114 = scmp.eq.s32.totalorder %s29, 1
      %p115 = por %p113, %p114
      %p117 = scmp.ne.s32.totalorder %s102, %s116
      %p118 = scmp.eq.s32.totalorder %s29, 0
      %p119 = por %p117, %p118
      %s121 = sadd.s32 %s120, 1
      %p124 = scmp.eq.s32.totalorder %s23, 1
      %p125 = scmp.ne.s32.totalorder %s120, %s122
      %p126 = scmp.eq.s32.totalorder %s23, 0
      %p127 = por %p125, %p126
      %p128 = scmp.ne.s32.totalorder %s120, %s122
      %p129 = scmp.eq.s32.totalorder %s28, 1
      %p130 = por %p128, %p129
      %p131 = scmp.ne.s32.totalorder %s122, %s123
      %p132 = scmp.eq.s32.totalorder %s28, 0
      %p133 = por %p131, %p132
      %p134 = scmp.ne.s32.totalorder %s122, %s123
      %p135 = scmp.eq.s32.totalorder %s29, 1
      %p136 = por %p134, %p135
      %p138 = scmp.ne.s32.totalorder %s123, %s137
      %p139 = scmp.eq.s32.totalorder %s29, 0
      %p140 = por %p138, %p139
      %s142 = sadd.s32 %s141, 1
      %p145 = scmp.eq.s32.totalorder %s23, 1
      %p146 = scmp.ne.s32.totalorder %s141, %s143
      %p147 = scmp.eq.s32.totalorder %s23, 0
      %p148 = por %p146, %p147
      %p149 = scmp.ne.s32.totalorder %s141, %s143
      %p150 = scmp.eq.s32.totalorder %s28, 1
      %p151 = por %p149, %p150
      %p152 = scmp.ne.s32.totalorder %s143, %s144
      %p153 = scmp.eq.s32.totalorder %s28, 0
      %p154 = por %p152, %p153
      %p155 = scmp.ne.s32.totalorder %s143, %s144
      %p156 = scmp.eq.s32.totalorder %s29, 1
      %p157 = por %p155, %p156
      %p159 = scmp.ne.s32.totalorder %s144, %s158
      %p160 = scmp.eq.s32.totalorder %s29, 0
      %p161 = por %p159, %p160
      %s163 = sadd.s32 %s162, 1
      %p166 = scmp.eq.s32.totalorder %s23, 1
      %p167 = scmp.ne.s32.totalorder %s162, %s164
      %p168 = scmp.eq.s32.totalorder %s23, 0
      %p169 = por %p167, %p168
      %p170 = scmp.ne.s32.totalorder %s162, %s164
      %p171 = scmp.eq.s32.totalorder %s28, 1
      %p172 = por %p170, %p171
      %p173 = scmp.ne.s32.totalorder %s164, %s165
      %p174 = scmp.eq.s32.totalorder %s28, 0
      %p175 = por %p173, %p174
      %p176 = scmp.ne.s32.totalorder %s164, %s165
      %p177 = scmp.eq.s32.totalorder %s29, 1
      %p178 = por %p176, %p177
      %p180 = scmp.ne.s32.totalorder %s165, %s179
      %p181 = scmp.eq.s32.totalorder %s29, 0
      %p182 = por %p180, %p181
      %s184 = sadd.s32 %s183, 1
      %p187 = scmp.eq.s32.totalorder %s23, 1
      %p188 = scmp.ne.s32.totalorder %s183, %s185
      %p189 = scmp.eq.s32.totalorder %s23, 0
      %p190 = por %p188, %p189
      %p191 = scmp.ne.s32.totalorder %s183, %s185
      %p192 = scmp.eq.s32.totalorder %s28, 1
      %p193 = por %p191, %p192
      %p194 = scmp.ne.s32.totalorder %s185, %s186
      %p195 = scmp.eq.s32.totalorder %s28, 0
      %p196 = por %p194, %p195
      %p197 = scmp.ne.s32.totalorder %s185, %s186
      %p198 = scmp.eq.s32.totalorder %s29, 1
      %p199 = por %p197, %p198
      %p201 = scmp.ne.s32.totalorder %s186, %s200
      %p202 = scmp.eq.s32.totalorder %s29, 0
      %p203 = por %p201, %p202
      %s205 = sadd.s32 %s204, 1
      %p208 = scmp.eq.s32.totalorder %s23, 1
      %p209 = scmp.ne.s32.totalorder %s204, %s206
      %p210 = scmp.eq.s32.totalorder %s23, 0
      %p211 = por %p209, %p210
      %p212 = scmp.ne.s32.totalorder %s204, %s206
      %p213 = scmp.eq.s32.totalorder %s28, 1
      %p214 = por %p212, %p213
      %p215 = scmp.ne.s32.totalorder %s206, %s207
      %p216 = scmp.eq.s32.totalorder %s28, 0
      %p217 = por %p215, %p216
      %p218 = scmp.ne.s32.totalorder %s206, %s207
      %p219 = scmp.eq.s32.totalorder %s29, 1
      %p220 = por %p218, %p219
      %p222 = scmp.ne.s32.totalorder %s207, %s221
      %p223 = scmp.eq.s32.totalorder %s29, 0
      %p224 = por %p222, %p223
      %s226 = sadd.s32 %s225, 1
      %p229 = scmp.eq.s32.totalorder %s23, 1
      %p230 = scmp.ne.s32.totalorder %s225, %s227
      %p231 = scmp.eq.s32.totalorder %s23, 0
      %p232 = por %p230, %p231
      %p233 = scmp.ne.s32.totalorder %s225, %s227
      %p234 = scmp.eq.s32.totalorder %s28, 1
      %p235 = por %p233, %p234
      %p236 = scmp.ne.s32.totalorder %s227, %s228
      %p237 = scmp.eq.s32.totalorder %s28, 0
      %p238 = por %p236, %p237
      %p239 = scmp.ne.s32.totalorder %s227, %s228
      %p240 = scmp.eq.s32.totalorder %s29, 1
      %p241 = por %p239, %p240
      %p243 = scmp.ne.s32.totalorder %s228, %s242
      %p244 = scmp.eq.s32.totalorder %s29, 0
      %p245 = por %p243, %p244
      %s247 = sadd.s32 %s246, 1
      %p250 = scmp.eq.s32.totalorder %s23, 1
      %p251 = scmp.ne.s32.totalorder %s246, %s248
      %p252 = scmp.eq.s32.totalorder %s23, 0
      %p253 = por %p251, %p252
      %p254 = scmp.ne.s32.totalorder %s246, %s248
      %p255 = scmp.eq.s32.totalorder %s28, 1
      %p256 = por %p254, %p255
      %p257 = scmp.ne.s32.totalorder %s248, %s249
      %p258 = scmp.eq.s32.totalorder %s28, 0
      %p259 = por %p257, %p258
      %p260 = scmp.ne.s32.totalorder %s248, %s249
      %p261 = scmp.eq.s32.totalorder %s29, 1
      %p262 = por %p260, %p261
      %p264 = scmp.ne.s32.totalorder %s249, %s263
      %p265 = scmp.eq.s32.totalorder %s29, 0
      %p266 = por %p264, %p265
      %s268 = sadd.s32 %s267, 1
      %p271 = scmp.eq.s32.totalorder %s23, 1
      %p272 = scmp.ne.s32.totalorder %s267, %s269
      %p273 = scmp.eq.s32.totalorder %s23, 0
      %p274 = por %p272, %p273
      %p275 = scmp.ne.s32.totalorder %s267, %s269
      %p276 = scmp.eq.s32.totalorder %s28, 1
      %p277 = por %p275, %p276
      %p278 = scmp.ne.s32.totalorder %s269, %s270
      %p279 = scmp.eq.s32.totalorder %s28, 0
      %p280 = por %p278, %p279
      %p281 = scmp.ne.s32.totalorder %s269, %s270
      %p282 = scmp.eq.s32.totalorder %s29, 1
      %p283 = por %p281, %p282
      %p285 = scmp.ne.s32.totalorder %s270, %s284
      %p286 = scmp.eq.s32.totalorder %s29, 0
      %p287 = por %p285, %p286
      %s288 = ssub.s32 %s23, %s30
      %p289 = scmp.eq.s32.totalorder %s288, 0
      %s291 = sadd.s32 %s290, 1
      %s292 = scalar_select %p289, %s290, %s291
      %p295 = pneg %p289
      %p296 = scmp.eq.s32.totalorder %s23, 1
      %p297 = por %p295, %p296
      %p298 = scmp.ne.s32.totalorder %s290, %s293
      %p299 = scmp.eq.s32.totalorder %s23, 0
      %p300 = por %p298, %p299
      %p301 = scmp.ne.s32.totalorder %s290, %s293
      %p302 = scmp.eq.s32.totalorder %s28, 1
      %p303 = por %p301, %p302
      %p304 = scmp.ne.s32.totalorder %s293, %s294
      %p305 = scmp.eq.s32.totalorder %s28, 0
      %p306 = por %p304, %p305
      %p307 = scmp.ne.s32.totalorder %s293, %s294
      %p308 = scmp.eq.s32.totalorder %s29, 1
      %p309 = por %p307, %p308
      %p311 = scmp.ne.s32.totalorder %s294, %s310
      %p312 = scmp.eq.s32.totalorder %s29, 0
      %p313 = por %p311, %p312
      %p314 = scmp.le.s32.totalorder 1, %s23
      %p315 = scmp.lt.s32.totalorder %s23, 3
      %p316 = pnand %p314, %p315
      %p317 = pneg %p316
      // Predicated region
      $region9: #{tpu_custom_call.1} parent=5 // pred_check
        _
      $region10: #{tpu_custom_call.1} parent=5 // pred_check_branch
        %319 = sbr.rel (%p316) target = $region12
      $region11: #{tpu_custom_call.1} parent=5 // pred_region
        %s320 = ssub.s32 %s23, 1
        // Predicated region
        $region13: #{tpu_custom_call.1} parent=11 // pred_check
          %p321 = pneg %p70
        $region14: #{tpu_custom_call.1} parent=11 // pred_check_branch
          %323 = sbr.rel (%p321) target = $region16
        $region15: #{tpu_custom_call.1} parent=11 // pred_region
          _
        $region16: #{tpu_custom_call.1} parent=11 // pred_fallthru
          _
        // Predicated region
        $region17: #{tpu_custom_call.1} parent=11 // pred_check
          %p324 = pneg %p91
        $region18: #{tpu_custom_call.1} parent=11 // pred_check_branch
          %326 = sbr.rel (%p324) target = $region20
        $region19: #{tpu_custom_call.1} parent=11 // pred_region
          _
        $region20: #{tpu_custom_call.1} parent=11 // pred_fallthru
          _
        // Predicated region
        $region21: #{tpu_custom_call.1} parent=11 // pred_check
          %p327 = pneg %p112
        $region22: #{tpu_custom_call.1} parent=11 // pred_check_branch
          %329 = sbr.rel (%p327) target = $region24
        $region23: #{tpu_custom_call.1} parent=11 // pred_region
          %s331 = ssub.s32 4608, 4608
          %332 = vsyncadd [#allocation3], %s331
          %s333 = sshll.u32 [#allocation2], 4
          %s334 = int_to_ptr.vmem [resolvable:$true] %s333
          %339 = dma.hbm_to_vmem [thread:$0]  %s3, 4608, %s334, [#allocation3], 256, 256, 16
        $region24: #{tpu_custom_call.1} parent=11 // pred_fallthru
          _
        // Predicated region
        $region25: #{tpu_custom_call.1} parent=11 // pred_check
          %p340 = pneg %p133
        $region26: #{tpu_custom_call.1} parent=11 // pred_check_branch
          %342 = sbr.rel (%p340) target = $region28
        $region27: #{tpu_custom_call.1} parent=11 // pred_region
          %s344 = ssub.s32 12800, 12800
          %345 = vsyncadd [#allocation6], %s344
          %s346 = sshll.u32 [#allocation5], 4
          %s347 = int_to_ptr.vmem [resolvable:$true] %s346
          %352 = dma.hbm_to_vmem [thread:$0]  %s4, 12800, %s347, [#allocation6], 256, 256, 16
        $region28: #{tpu_custom_call.1} parent=11 // pred_fallthru
          _
        // Predicated region
        $region29: #{tpu_custom_call.1} parent=11 // pred_check
          %p353 = pneg %p154
        $region30: #{tpu_custom_call.1} parent=11 // pred_check_branch
          %355 = sbr.rel (%p353) target = $region32
        $region31: #{tpu_custom_call.1} parent=11 // pred_region
          _
        $region32: #{tpu_custom_call.1} parent=11 // pred_fallthru
          _
        // Predicated region
        $region33: #{tpu_custom_call.1} parent=11 // pred_check
          %p356 = pneg %p175
        $region34: #{tpu_custom_call.1} parent=11 // pred_check_branch
          %358 = sbr.rel (%p356) target = $region36
        $region35: #{tpu_custom_call.1} parent=11 // pred_region
          _
        $region36: #{tpu_custom_call.1} parent=11 // pred_fallthru
          _
        // Predicated region
        $region37: #{tpu_custom_call.1} parent=11 // pred_check
          %p359 = pneg %p196
        $region38: #{tpu_custom_call.1} parent=11 // pred_check_branch
          %361 = sbr.rel (%p359) target = $region40
        $region39: #{tpu_custom_call.1} parent=11 // pred_region
          _
        $region40: #{tpu_custom_call.1} parent=11 // pred_fallthru
          _
        // Predicated region
        $region41: #{tpu_custom_call.1} parent=11 // pred_check
          %p362 = pneg %p217
        $region42: #{tpu_custom_call.1} parent=11 // pred_check_branch
          %364 = sbr.rel (%p362) target = $region44
        $region43: #{tpu_custom_call.1} parent=11 // pred_region
          _
        $region44: #{tpu_custom_call.1} parent=11 // pred_fallthru
          _
        // Predicated region
        $region45: #{tpu_custom_call.1} parent=11 // pred_check
          %p365 = pneg %p238
        $region46: #{tpu_custom_call.1} parent=11 // pred_check_branch
          %367 = sbr.rel (%p365) target = $region48
        $region47: #{tpu_custom_call.1} parent=11 // pred_region
          _
        $region48: #{tpu_custom_call.1} parent=11 // pred_fallthru
          _
        // Predicated region
        $region49: #{tpu_custom_call.1} parent=11 // pred_check
          %p368 = pneg %p259
        $region50: #{tpu_custom_call.1} parent=11 // pred_check_branch
          %370 = sbr.rel (%p368) target = $region52
        $region51: #{tpu_custom_call.1} parent=11 // pred_region
          _
        $region52: #{tpu_custom_call.1} parent=11 // pred_fallthru
          _
        // Predicated region
        $region53: #{tpu_custom_call.1} parent=11 // pred_check
          %p371 = pneg %p280
        $region54: #{tpu_custom_call.1} parent=11 // pred_check_branch
          %373 = sbr.rel (%p371) target = $region56
        $region55: #{tpu_custom_call.1} parent=11 // pred_region
          _
        $region56: #{tpu_custom_call.1} parent=11 // pred_fallthru
          _
      $region12: #{tpu_custom_call.1} parent=5 // pred_fallthru
        _
      %p374 = scmp.lt.s32.totalorder %s23, 2
      // Predicated region
      $region57: #{tpu_custom_call.1} parent=5 // pred_check
        %p375 = pneg %p374
      $region58: #{tpu_custom_call.1} parent=5 // pred_check_branch
        %377 = sbr.rel (%p375) target = $region60
      $region59: #{tpu_custom_call.1} parent=5 // pred_region
        // Predicated region
        $region61: #{tpu_custom_call.1} parent=59 // pred_check
          %p378 = pneg %p43
        $region62: #{tpu_custom_call.1} parent=59 // pred_check_branch
          %380 = sbr.rel (%p378) target = $region64
        $region63: #{tpu_custom_call.1} parent=59 // pred_region
          %p381 = scmp.lt.s32.totalorder %s23, 1
          %s382 = scalar_select %p381, %s23, 1
          %s383 = smul.addr %s382, 4
          %s384 = smul.addr %s383, 8
          %s385 = scalar_lea.vmem %s0, %s384
        $region64: #{tpu_custom_call.1} parent=59 // pred_fallthru
          _
      $region60: #{tpu_custom_call.1} parent=5 // pred_fallthru
        _
      %p386 = scmp.le.s32.totalorder 1, %s23
      %p387 = scmp.lt.s32.totalorder %s23, 3
      %p388 = pnand %p386, %p387
      %p389 = pneg %p388
      // Predicated region
      $region65: #{tpu_custom_call.1} parent=5 // pred_check
        _
      $region66: #{tpu_custom_call.1} parent=5 // pred_check_branch
        %391 = sbr.rel (%p388) target = $region68
      $region67: #{tpu_custom_call.1} parent=5 // pred_region
        %s392 = ssub.s32 %s23, 1
        // Predicated region
        $region69: #{tpu_custom_call.1} parent=67 // pred_check
          %p393 = pneg %p112
        $region70: #{tpu_custom_call.1} parent=67 // pred_check_branch
          %395 = sbr.rel (%p393) target = $region72
        $region71: #{tpu_custom_call.1} parent=67 // pred_region
          %396 = dma.done [#allocation3], 4608
        $region72: #{tpu_custom_call.1} parent=67 // pred_fallthru
          _
        // Predicated region
        $region73: #{tpu_custom_call.1} parent=67 // pred_check
          %p397 = pneg %p133
        $region74: #{tpu_custom_call.1} parent=67 // pred_check_branch
          %399 = sbr.rel (%p397) target = $region76
        $region75: #{tpu_custom_call.1} parent=67 // pred_region
          %400 = dma.done [#allocation6], 12800
        $region76: #{tpu_custom_call.1} parent=67 // pred_fallthru
          _
        %p401 = scmp.lt.s32.totalorder %s28, 1
        %s402 = scalar_select %p401, %s28, 1
        %s403 = smul.addr %s402, 4
        %s404 = smul.addr %s403, 8
        %s405 = scalar_lea.vmem %s0, %s404
        %p406 = pneg %p49
        %p407 = pneg %p46
        %p408 = pneg %p70
        %p409 = pneg %p67
        %p410 = pneg %p91
        %p411 = pneg %p88
        %p412 = pneg %p112
        %p413 = pneg %p109
        %p414 = pneg %p133
        %p415 = pneg %p130
        %p416 = pneg %p154
        %p417 = pneg %p151
        %p418 = pneg %p175
        %p419 = pneg %p172
        %p420 = pneg %p196
        %p421 = pneg %p193
        %p422 = pneg %p217
        %p423 = pneg %p214
        %p424 = pneg %p238
        %p425 = pneg %p235
        %p426 = pneg %p259
        %p427 = pneg %p256
        %p428 = pneg %p280
        %p429 = pneg %p277
        %p430 = pneg %p306
        %p431 = pneg %p303
        %s432 = sand.u32 %s293, 1
        %s433 = scalar_lea.sflag [#allocation4], %s432
        %s434 = sand.u32 %s293, 1
        %s435 = smul.addr %s434, 32
        %s436 = scalar_lea.vmem [#allocation7], %s435
        %p437 = scmp.lt.s32.totalorder %s28, 1
        %s438 = scalar_select %p437, %s28, 1
        %s439 = smul.addr %s438, 4
        %s440 = smul.addr %s439, 8
        %s441 = scalar_lea.vmem %s0, %s440
        %v443 = vld [vmem:[%s441] sm:$0xff]
        %v444 = vld [vmem:[%s441 + $0x8] sm:$0xff]
        %v445 = vld [vmem:[%s441 + $0x10] sm:$0xff]
        %v446 = vld [vmem:[%s441 + $0x18] sm:$0xff]
        %v447 = vld [vmem:[%s1] sm:$0xf]
        %v448 = vld [vmem:[%s1 + $0x4] sm:$0xf]
        %v449 = vld [vmem:[%s1 + $0x8] sm:$0xf]
        %v450 = vld [vmem:[%s1 + $0xc] sm:$0xf]
        %v451 = vpack.c.bf16 %v445, %v443
        %v452 = vpack.c.bf16 %v446, %v444
        %v453 = vld [vmem:[%s2] sm:$0xff]
        %v454 = vld [vmem:[%s2 + $0x8] sm:$0xff]
        %v455 = vld [vmem:[%s2 + $0x10] sm:$0xff]
        %v456 = vld [vmem:[%s2 + $0x18] sm:$0xff]
        %458 = vset.pattern.permute.xlu0 0
        %459 = vperm.xlu0 %458, %v453
        %v460 = vpop.permute.xlu0 %459
        %463 = vset.pattern.permute.xlu0 0
        %464 = vperm.xlu0 %463, %v454
        %v465 = vpop.permute.xlu0 %464
        %468 = vset.pattern.permute.xlu0 0
        %469 = vperm.xlu0 %468, %v455
        %v470 = vpop.permute.xlu0 %469
        %473 = vset.pattern.permute.xlu0 0
        %474 = vperm.xlu0 %473, %v456
        %v475 = vpop.permute.xlu0 %474
        %v481 = vunpack.c.l.b16 %v447
        %v482 = vunpack.c.l.b16 %v448
        %v483 = vunpack.c.l.b16 %v449
        %v484 = vunpack.c.l.b16 %v450
        %v485 = vpack.c.b16 %v482, %v481
        %v486 = vpack.c.b16 %v484, %v483
        %vm487 = vcmask 130048
        %v489 = vsel %vm487, %v485, 0
        %v492 = vsel %vm487, %v486, 0
        %494 = vmatprep.subr.bf16.mxu0 0
        %495 = vmatpush1.bf16.msra.mxu0 0
        %496 = vmatprep.subr.bf16.mxu0 0
        %497 = vmatpush1.bf16.msra.mxu0 0
        %498 = vmatprep.subr.bf16.mxu0 0
        %499 = vmatpush1.bf16.msra.mxu0 0
        %500 = vmatprep.subr.bf16.mxu0 0
        %501 = vmatpush1.bf16.msra.mxu0 0
        %502 = vmatprep.subr.bf16.mxu0 0
        %503 = vmatpush1.bf16.msra.mxu0 0
        %504 = vmatprep.subr.bf16.mxu0 0
        %505 = vmatpush1.bf16.msra.mxu0 0
        %506 = vmatprep.subr.bf16.mxu0 0
        %507 = vmatpush1.bf16.msra.mxu0 0
        %508 = vmatprep.subr.bf16.mxu0 %v452
        %509 = vmatpush1.bf16.msra.mxu0 %v451
        %510 = vmatprep.subr.bf16.mxu0 0
        %511 = vmatpush2.bf16.msra.mxu0 0
        %512 = vmatprep.subr.bf16.mxu0 0
        %513 = vmatpush2.bf16.msra.mxu0 0
        %514 = vmatprep.subr.bf16.mxu0 0
        %515 = vmatpush2.bf16.msra.mxu0 0
        %516 = vmatprep.subr.bf16.mxu0 0
        %517 = vmatpush2.bf16.msra.mxu0 0
        %518 = vmatprep.subr.bf16.mxu0 0
        %519 = vmatpush2.bf16.msra.mxu0 0
        %520 = vmatprep.subr.bf16.mxu0 0
        %521 = vmatpush2.bf16.msra.mxu0 0
        %522 = vmatprep.subr.bf16.mxu0 0
        %523 = vmatpush2.bf16.msra.mxu0 0
        %524 = vmatprep.subr.bf16.mxu0 0
        %525 = vmatpush2.bf16.msra.mxu0 0
        %526 = vmatprep.mubr.bf16.mxu0 0
        %527 = vmatmul.mubr.bf16.gmra.mxu0 %v489
        %v528 = vpop.f32.mrf.mxu0
        %v529 = vadd.f32 %v460, %v528
        %v530 = vpop.f32.mrf.mxu0
        %v531 = vadd.f32 %v460, %v530
        %v532 = vpop.f32.mrf.mxu0
        %v533 = vadd.f32 %v465, %v532
        %v534 = vpop.f32.mrf.mxu0
        %v535 = vadd.f32 %v465, %v534
        %536 = vmatprep.mubr.bf16.mxu0 0
        %537 = vmatmul.mubr.bf16.gmra.mxu0 %v492
        %v538 = vpop.f32.mrf.mxu0
        %v539 = vadd.f32 %v470, %v538
        %v540 = vpop.f32.mrf.mxu0
        %v541 = vadd.f32 %v470, %v540
        %v542 = vpop.f32.mrf.mxu0
        %v543 = vadd.f32 %v475, %v542
        %v544 = vpop.f32.mrf.mxu0
        %v545 = vadd.f32 %v475, %v544
        %546 = vdwg.mxu0
        %v547 = vxor.u32 %v529, 2147483648
        %v548 = vxor.u32 %v531, 2147483648
        %v549 = vxor.u32 %v533, 2147483648
        %v550 = vxor.u32 %v535, 2147483648
        %v551 = vxor.u32 %v539, 2147483648
        %v552 = vxor.u32 %v541, 2147483648
        %v553 = vxor.u32 %v543, 2147483648
        %v554 = vxor.u32 %v545, 2147483648
        %v555 = vmul.f32 %v547, 1.442695
        %v556 = vpow.pop %v555
        %v557 = vmul.f32 %v548, 1.442695
        %v558 = vpow.pop %v557
        %v559 = vmul.f32 %v549, 1.442695
        %v560 = vpow.pop %v559
        %v561 = vmul.f32 %v550, 1.442695
        %v562 = vpow.pop %v561
        %v563 = vmul.f32 %v551, 1.442695
        %v564 = vpow.pop %v563
        %v565 = vmul.f32 %v552, 1.442695
        %v566 = vpow.pop %v565
        %v567 = vmul.f32 %v553, 1.442695
        %v568 = vpow.pop %v567
        %v569 = vmul.f32 %v554, 1.442695
        %v570 = vpow.pop %v569
        %v571 = vadd.f32 %v556, 1.0
        %v572 = vadd.f32 %v558, 1.0
        %v573 = vadd.f32 %v560, 1.0
        %v574 = vadd.f32 %v562, 1.0
        %v575 = vadd.f32 %v564, 1.0
        %v576 = vadd.f32 %v566, 1.0
        %v577 = vadd.f32 %v568, 1.0
        %v578 = vadd.f32 %v570, 1.0
        %v579 = vrcp.pop %v571
        %v580 = vmul.f32 1.0, %v579
        %v581 = vrcp.pop %v572
        %v582 = vmul.f32 1.0, %v581
        %v583 = vrcp.pop %v573
        %v584 = vmul.f32 1.0, %v583
        %v585 = vrcp.pop %v574
        %v586 = vmul.f32 1.0, %v585
        %v587 = vrcp.pop %v575
        %v588 = vmul.f32 1.0, %v587
        %v589 = vrcp.pop %v576
        %v590 = vmul.f32 1.0, %v589
        %v591 = vrcp.pop %v577
        %v592 = vmul.f32 1.0, %v591
        %v593 = vrcp.pop %v578
        %v594 = vmul.f32 1.0, %v593
        %v595 = vmul.f32 %v529, %v580
        %v596 = vmul.f32 %v531, %v582
        %v597 = vmul.f32 %v533, %v584
        %v598 = vmul.f32 %v535, %v586
        %v599 = vmul.f32 %v539, %v588
        %v600 = vmul.f32 %v541, %v590
        %v601 = vmul.f32 %v543, %v592
        %v602 = vmul.f32 %v545, %v594
        %603 = vrot.lane.b32.xlu0 %v595, 17
        %v604 = vpop.permute.xlu0 %603
        %605 = vrot.lane.b32.xlu0 %v597, 17
        %v606 = vpop.permute.xlu0 %605
        %607 = vrot.lane.b32.xlu0 %v596, 17
        %v608 = vpop.permute.xlu0 %607
        %609 = vrot.lane.b32.xlu0 %v598, 17
        %v610 = vpop.permute.xlu0 %609
        %v611 = vlaneseq
        %v612 = vand.u32 %v611, 127
        %vm613 = vcmp.lt.s32.totalorder %v612, 17
        %v614 = vsel %vm613, %v604, %v608
        %v615 = vsel %vm613, %v606, %v610
        %v616 = vsel %vm613, %v608, %v604
        %v617 = vsel %vm613, %v610, %v606
        %v618 = vld [vmem:[#allocation2] sm:$0xff]
        %v619 = vld [vmem:[#allocation2 + $0x8] sm:$0xff]
        %v620 = vld [vmem:[#allocation2 + $0x10] sm:$0xff]
        %v621 = vld [vmem:[#allocation2 + $0x18] sm:$0xff]
        %v622 = vmul.f32 %v616, %v618
        %v623 = vmul.f32 %v614, %v619
        %v624 = vmul.f32 %v617, %v620
        %v625 = vmul.f32 %v615, %v621
        %626 = vrot.lane.b32.xlu0 %v595, 16
        %v627 = vpop.permute.xlu0 %626
        %628 = vrot.lane.b32.xlu0 %v597, 16
        %v629 = vpop.permute.xlu0 %628
        %630 = vrot.lane.b32.xlu0 %v596, 16
        %v631 = vpop.permute.xlu0 %630
        %632 = vrot.lane.b32.xlu0 %v598, 16
        %v633 = vpop.permute.xlu0 %632
        %vm634 = vcmp.lt.s32.totalorder %v612, 16
        %v635 = vsel %vm634, %v627, %v631
        %v636 = vsel %vm634, %v629, %v633
        %v637 = vsel %vm634, %v631, %v627
        %v638 = vsel %vm634, %v633, %v629
        %s639 = scalar_lea.vmem [#allocation2], 32
        %v640 = vld [vmem:[%s639] sm:$0xff]
        %v641 = vld [vmem:[%s639 + $0x8] sm:$0xff]
        %v642 = vld [vmem:[%s639 + $0x10] sm:$0xff]
        %v643 = vld [vmem:[%s639 + $0x18] sm:$0xff]
        %v644 = vmul.f32 %v637, %v640
        %v645 = vmul.f32 %v635, %v641
        %v646 = vmul.f32 %v638, %v642
        %v647 = vmul.f32 %v636, %v643
        %v648 = vadd.f32 %v622, %v644
        %v649 = vadd.f32 %v623, %v645
        %v650 = vadd.f32 %v624, %v646
        %v651 = vadd.f32 %v625, %v647
        %652 = vrot.lane.b32.xlu0 %v595, 15
        %v653 = vpop.permute.xlu0 %652
        %654 = vrot.lane.b32.xlu0 %v597, 15
        %v655 = vpop.permute.xlu0 %654
        %656 = vrot.lane.b32.xlu0 %v596, 15
        %v657 = vpop.permute.xlu0 %656
        %658 = vrot.lane.b32.xlu0 %v598, 15
        %v659 = vpop.permute.xlu0 %658
        %vm660 = vcmp.lt.s32.totalorder %v612, 15
        %v661 = vsel %vm660, %v653, %v657
        %v662 = vsel %vm660, %v655, %v659
        %v663 = vsel %vm660, %v657, %v653
        %v664 = vsel %vm660, %v659, %v655
        %s665 = scalar_lea.vmem [#allocation2], 64
        %v666 = vld [vmem:[%s665] sm:$0xff]
        %v667 = vld [vmem:[%s665 + $0x8] sm:$0xff]
        %v668 = vld [vmem:[%s665 + $0x10] sm:$0xff]
        %v669 = vld [vmem:[%s665 + $0x18] sm:$0xff]
        %v670 = vmul.f32 %v663, %v666
        %v671 = vmul.f32 %v661, %v667
        %v672 = vmul.f32 %v664, %v668
        %v673 = vmul.f32 %v662, %v669
        %v674 = vadd.f32 %v648, %v670
        %v675 = vadd.f32 %v649, %v671
        %v676 = vadd.f32 %v650, %v672
        %v677 = vadd.f32 %v651, %v673
        %678 = vrot.lane.b32.xlu0 %v595, 1
        %v679 = vpop.permute.xlu0 %678
        %680 = vrot.lane.b32.xlu0 %v597, 1
        %v681 = vpop.permute.xlu0 %680
        %682 = vrot.lane.b32.xlu0 %v596, 1
        %v683 = vpop.permute.xlu0 %682
        %684 = vrot.lane.b32.xlu0 %v598, 1
        %v685 = vpop.permute.xlu0 %684
        %vm686 = vcmp.lt.s32.totalorder %v612, 1
        %v687 = vsel %vm686, %v679, %v683
        %v688 = vsel %vm686, %v681, %v685
        %v689 = vsel %vm686, %v683, %v679
        %v690 = vsel %vm686, %v685, %v681
        %s691 = scalar_lea.vmem [#allocation2], 96
        %v692 = vld [vmem:[%s691] sm:$0xff]
        %v693 = vld [vmem:[%s691 + $0x8] sm:$0xff]
        %v694 = vld [vmem:[%s691 + $0x10] sm:$0xff]
        %v695 = vld [vmem:[%s691 + $0x18] sm:$0xff]
        %v696 = vmul.f32 %v689, %v692
        %v697 = vmul.f32 %v687, %v693
        %v698 = vmul.f32 %v690, %v694
        %v699 = vmul.f32 %v688, %v695
        %v700 = vadd.f32 %v674, %v696
        %v701 = vadd.f32 %v675, %v697
        %v702 = vadd.f32 %v676, %v698
        %v703 = vadd.f32 %v677, %v699
        %s704 = scalar_lea.vmem [#allocation2], 128
        %v705 = vld [vmem:[%s704] sm:$0xff]
        %v706 = vld [vmem:[%s704 + $0x8] sm:$0xff]
        %v707 = vld [vmem:[%s704 + $0x10] sm:$0xff]
        %v708 = vld [vmem:[%s704 + $0x18] sm:$0xff]
        %v709 = vmul.f32 %v595, %v705
        %v710 = vmul.f32 %v596, %v706
        %v711 = vmul.f32 %v597, %v707
        %v712 = vmul.f32 %v598, %v708
        %v713 = vadd.f32 %v700, %v709
        %v714 = vadd.f32 %v701, %v710
        %v715 = vadd.f32 %v702, %v711
        %v716 = vadd.f32 %v703, %v712
        %717 = vrot.lane.b32.xlu0 %v595, 127
        %v718 = vpop.permute.xlu0 %717
        %719 = vrot.lane.b32.xlu0 %v597, 127
        %v720 = vpop.permute.xlu0 %719
        %721 = vrot.lane.b32.xlu0 %v596, 127
        %v722 = vpop.permute.xlu0 %721
        %723 = vrot.lane.b32.xlu0 %v598, 127
        %v724 = vpop.permute.xlu0 %723
        %vm725 = vcmp.lt.s32.totalorder %v612, 127
        %v726 = vsel %vm725, %v718, %v722
        %v727 = vsel %vm725, %v720, %v724
        %v728 = vsel %vm725, %v722, %v718
        %v729 = vsel %vm725, %v724, %v720
        %s730 = scalar_lea.vmem [#allocation2], 160
        %v731 = vld [vmem:[%s730] sm:$0xff]
        %v732 = vld [vmem:[%s730 + $0x8] sm:$0xff]
        %v733 = vld [vmem:[%s730 + $0x10] sm:$0xff]
        %v734 = vld [vmem:[%s730 + $0x18] sm:$0xff]
        %v735 = vmul.f32 %v726, %v731
        %v736 = vmul.f32 %v728, %v732
        %v737 = vmul.f32 %v727, %v733
        %v738 = vmul.f32 %v729, %v734
        %v739 = vadd.f32 %v713, %v735
        %v740 = vadd.f32 %v714, %v736
        %v741 = vadd.f32 %v715, %v737
        %v742 = vadd.f32 %v716, %v738
        %743 = vrot.lane.b32.xlu0 %v595, 113
        %v744 = vpop.permute.xlu0 %743
        %745 = vrot.lane.b32.xlu0 %v597, 113
        %v746 = vpop.permute.xlu0 %745
        %747 = vrot.lane.b32.xlu0 %v596, 113
        %v748 = vpop.permute.xlu0 %747
        %749 = vrot.lane.b32.xlu0 %v598, 113
        %v750 = vpop.permute.xlu0 %749
        %vm751 = vcmp.lt.s32.totalorder %v612, 113
        %v752 = vsel %vm751, %v744, %v748
        %v753 = vsel %vm751, %v746, %v750
        %v754 = vsel %vm751, %v748, %v744
        %v755 = vsel %vm751, %v750, %v746
        %s756 = scalar_lea.vmem [#allocation2], 192
        %v757 = vld [vmem:[%s756] sm:$0xff]
        %v758 = vld [vmem:[%s756 + $0x8] sm:$0xff]
        %v759 = vld [vmem:[%s756 + $0x10] sm:$0xff]
        %v760 = vld [vmem:[%s756 + $0x18] sm:$0xff]
        %v761 = vmul.f32 %v752, %v757
        %v762 = vmul.f32 %v754, %v758
        %v763 = vmul.f32 %v753, %v759
        %v764 = vmul.f32 %v755, %v760
        %v765 = vadd.f32 %v739, %v761
        %v766 = vadd.f32 %v740, %v762
        %v767 = vadd.f32 %v741, %v763
        %v768 = vadd.f32 %v742, %v764
        %769 = vrot.lane.b32.xlu0 %v595, 112
        %v770 = vpop.permute.xlu0 %769
        %771 = vrot.lane.b32.xlu0 %v597, 112
        %v772 = vpop.permute.xlu0 %771
        %773 = vrot.lane.b32.xlu0 %v596, 112
        %v774 = vpop.permute.xlu0 %773
        %775 = vrot.lane.b32.xlu0 %v598, 112
        %v776 = vpop.permute.xlu0 %775
        %vm777 = vcmp.lt.s32.totalorder %v612, 112
        %v778 = vsel %vm777, %v770, %v774
        %v779 = vsel %vm777, %v772, %v776
        %v780 = vsel %vm777, %v774, %v770
        %v781 = vsel %vm777, %v776, %v772
        %s782 = scalar_lea.vmem [#allocation2], 224
        %v783 = vld [vmem:[%s782] sm:$0xff]
        %v784 = vld [vmem:[%s782 + $0x8] sm:$0xff]
        %v785 = vld [vmem:[%s782 + $0x10] sm:$0xff]
        %v786 = vld [vmem:[%s782 + $0x18] sm:$0xff]
        %v787 = vmul.f32 %v778, %v783
        %v788 = vmul.f32 %v780, %v784
        %v789 = vmul.f32 %v779, %v785
        %v790 = vmul.f32 %v781, %v786
        %v791 = vadd.f32 %v765, %v787
        %v792 = vadd.f32 %v766, %v788
        %v793 = vadd.f32 %v767, %v789
        %v794 = vadd.f32 %v768, %v790
        %795 = vrot.lane.b32.xlu0 %v595, 111
        %v796 = vpop.permute.xlu0 %795
        %797 = vrot.lane.b32.xlu0 %v597, 111
        %v798 = vpop.permute.xlu0 %797
        %799 = vrot.lane.b32.xlu0 %v596, 111
        %v800 = vpop.permute.xlu0 %799
        %801 = vrot.lane.b32.xlu0 %v598, 111
        %v802 = vpop.permute.xlu0 %801
        %vm803 = vcmp.lt.s32.totalorder %v612, 111
        %v804 = vsel %vm803, %v796, %v800
        %v805 = vsel %vm803, %v798, %v802
        %v806 = vsel %vm803, %v800, %v796
        %v807 = vsel %vm803, %v802, %v798
        %s808 = scalar_lea.vmem [#allocation2], 256
        %v809 = vld [vmem:[%s808] sm:$0xff]
        %v810 = vld [vmem:[%s808 + $0x8] sm:$0xff]
        %v811 = vld [vmem:[%s808 + $0x10] sm:$0xff]
        %v812 = vld [vmem:[%s808 + $0x18] sm:$0xff]
        %v813 = vmul.f32 %v804, %v809
        %v814 = vmul.f32 %v806, %v810
        %v815 = vmul.f32 %v805, %v811
        %v816 = vmul.f32 %v807, %v812
        %v817 = vadd.f32 %v791, %v813
        %v818 = vadd.f32 %v792, %v814
        %v819 = vadd.f32 %v793, %v815
        %v820 = vadd.f32 %v794, %v816
        %821 = vrot.lane.b32.xlu0 %v599, 34
        %v822 = vpop.permute.xlu0 %821
        %823 = vrot.lane.b32.xlu0 %v601, 34
        %v824 = vpop.permute.xlu0 %823
        %825 = vrot.lane.b32.xlu0 %v600, 34
        %v826 = vpop.permute.xlu0 %825
        %827 = vrot.lane.b32.xlu0 %v602, 34
        %v828 = vpop.permute.xlu0 %827
        %vm829 = vcmp.lt.s32.totalorder %v612, 34
        %v830 = vsel %vm829, %v822, %v826
        %v831 = vsel %vm829, %v824, %v828
        %v832 = vsel %vm829, %v826, %v822
        %v833 = vsel %vm829, %v828, %v824
        %v834 = vld [vmem:[#allocation5] sm:$0xff]
        %v835 = vld [vmem:[#allocation5 + $0x8] sm:$0xff]
        %v836 = vld [vmem:[#allocation5 + $0x10] sm:$0xff]
        %v837 = vld [vmem:[#allocation5 + $0x18] sm:$0xff]
        %v838 = vmul.f32 %v832, %v834
        %v839 = vmul.f32 %v830, %v835
        %v840 = vmul.f32 %v833, %v836
        %v841 = vmul.f32 %v831, %v837
        %842 = vrot.lane.b32.xlu0 %v599, 33
        %v843 = vpop.permute.xlu0 %842
        %844 = vrot.lane.b32.xlu0 %v601, 33
        %v845 = vpop.permute.xlu0 %844
        %846 = vrot.lane.b32.xlu0 %v600, 33
        %v847 = vpop.permute.xlu0 %846
        %848 = vrot.lane.b32.xlu0 %v602, 33
        %v849 = vpop.permute.xlu0 %848
        %vm850 = vcmp.lt.s32.totalorder %v612, 33
        %v851 = vsel %vm850, %v843, %v847
        %v852 = vsel %vm850, %v845, %v849
        %v853 = vsel %vm850, %v847, %v843
        %v854 = vsel %vm850, %v849, %v845
        %s855 = scalar_lea.vmem [#allocation5], 32
        %v856 = vld [vmem:[%s855] sm:$0xff]
        %v857 = vld [vmem:[%s855 + $0x8] sm:$0xff]
        %v858 = vld [vmem:[%s855 + $0x10] sm:$0xff]
        %v859 = vld [vmem:[%s855 + $0x18] sm:$0xff]
        %v860 = vmul.f32 %v853, %v856
        %v861 = vmul.f32 %v851, %v857
        %v862 = vmul.f32 %v854, %v858
        %v863 = vmul.f32 %v852, %v859
        %v864 = vadd.f32 %v838, %v860
        %v865 = vadd.f32 %v839, %v861
        %v866 = vadd.f32 %v840, %v862
        %v867 = vadd.f32 %v841, %v863
        %868 = vrot.lane.b32.xlu0 %v599, 32
        %v869 = vpop.permute.xlu0 %868
        %870 = vrot.lane.b32.xlu0 %v601, 32
        %v871 = vpop.permute.xlu0 %870
        %872 = vrot.lane.b32.xlu0 %v600, 32
        %v873 = vpop.permute.xlu0 %872
        %874 = vrot.lane.b32.xlu0 %v602, 32
        %v875 = vpop.permute.xlu0 %874
        %vm876 = vcmp.lt.s32.totalorder %v612, 32
        %v877 = vsel %vm876, %v869, %v873
        %v878 = vsel %vm876, %v871, %v875
        %v879 = vsel %vm876, %v873, %v869
        %v880 = vsel %vm876, %v875, %v871
        %s881 = scalar_lea.vmem [#allocation5], 64
        %v882 = vld [vmem:[%s881] sm:$0xff]
        %v883 = vld [vmem:[%s881 + $0x8] sm:$0xff]
        %v884 = vld [vmem:[%s881 + $0x10] sm:$0xff]
        %v885 = vld [vmem:[%s881 + $0x18] sm:$0xff]
        %v886 = vmul.f32 %v879, %v882
        %v887 = vmul.f32 %v877, %v883
        %v888 = vmul.f32 %v880, %v884
        %v889 = vmul.f32 %v878, %v885
        %v890 = vadd.f32 %v864, %v886
        %v891 = vadd.f32 %v865, %v887
        %v892 = vadd.f32 %v866, %v888
        %v893 = vadd.f32 %v867, %v889
        %894 = vrot.lane.b32.xlu0 %v599, 31
        %v895 = vpop.permute.xlu0 %894
        %896 = vrot.lane.b32.xlu0 %v601, 31
        %v897 = vpop.permute.xlu0 %896
        %898 = vrot.lane.b32.xlu0 %v600, 31
        %v899 = vpop.permute.xlu0 %898
        %900 = vrot.lane.b32.xlu0 %v602, 31
        %v901 = vpop.permute.xlu0 %900
        %vm902 = vcmp.lt.s32.totalorder %v612, 31
        %v903 = vsel %vm902, %v895, %v899
        %v904 = vsel %vm902, %v897, %v901
        %v905 = vsel %vm902, %v899, %v895
        %v906 = vsel %vm902, %v901, %v897
        %s907 = scalar_lea.vmem [#allocation5], 96
        %v908 = vld [vmem:[%s907] sm:$0xff]
        %v909 = vld [vmem:[%s907 + $0x8] sm:$0xff]
        %v910 = vld [vmem:[%s907 + $0x10] sm:$0xff]
        %v911 = vld [vmem:[%s907 + $0x18] sm:$0xff]
        %v912 = vmul.f32 %v905, %v908
        %v913 = vmul.f32 %v903, %v909
        %v914 = vmul.f32 %v906, %v910
        %v915 = vmul.f32 %v904, %v911
        %v916 = vadd.f32 %v890, %v912
        %v917 = vadd.f32 %v891, %v913
        %v918 = vadd.f32 %v892, %v914
        %v919 = vadd.f32 %v893, %v915
        %920 = vrot.lane.b32.xlu0 %v599, 30
        %v921 = vpop.permute.xlu0 %920
        %922 = vrot.lane.b32.xlu0 %v601, 30
        %v923 = vpop.permute.xlu0 %922
        %924 = vrot.lane.b32.xlu0 %v600, 30
        %v925 = vpop.permute.xlu0 %924
        %926 = vrot.lane.b32.xlu0 %v602, 30
        %v927 = vpop.permute.xlu0 %926
        %vm928 = vcmp.lt.s32.totalorder %v612, 30
        %v929 = vsel %vm928, %v921, %v925
        %v930 = vsel %vm928, %v923, %v927
        %v931 = vsel %vm928, %v925, %v921
        %v932 = vsel %vm928, %v927, %v923
        %s933 = scalar_lea.vmem [#allocation5], 128
        %v934 = vld [vmem:[%s933] sm:$0xff]
        %v935 = vld [vmem:[%s933 + $0x8] sm:$0xff]
        %v936 = vld [vmem:[%s933 + $0x10] sm:$0xff]
        %v937 = vld [vmem:[%s933 + $0x18] sm:$0xff]
        %v938 = vmul.f32 %v931, %v934
        %v939 = vmul.f32 %v929, %v935
        %v940 = vmul.f32 %v932, %v936
        %v941 = vmul.f32 %v930, %v937
        %v942 = vadd.f32 %v916, %v938
        %v943 = vadd.f32 %v917, %v939
        %v944 = vadd.f32 %v918, %v940
        %v945 = vadd.f32 %v919, %v941
        %946 = vrot.lane.b32.xlu0 %v599, 18
        %v947 = vpop.permute.xlu0 %946
        %948 = vrot.lane.b32.xlu0 %v601, 18
        %v949 = vpop.permute.xlu0 %948
        %950 = vrot.lane.b32.xlu0 %v600, 18
        %v951 = vpop.permute.xlu0 %950
        %952 = vrot.lane.b32.xlu0 %v602, 18
        %v953 = vpop.permute.xlu0 %952
        %vm954 = vcmp.lt.s32.totalorder %v612, 18
        %v955 = vsel %vm954, %v947, %v951
        %v956 = vsel %vm954, %v949, %v953
        %v957 = vsel %vm954, %v951, %v947
        %v958 = vsel %vm954, %v953, %v949
        %s959 = scalar_lea.vmem [#allocation5], 160
        %v960 = vld [vmem:[%s959] sm:$0xff]
        %v961 = vld [vmem:[%s959 + $0x8] sm:$0xff]
        %v962 = vld [vmem:[%s959 + $0x10] sm:$0xff]
        %v963 = vld [vmem:[%s959 + $0x18] sm:$0xff]
        %v964 = vmul.f32 %v957, %v960
        %v965 = vmul.f32 %v955, %v961
        %v966 = vmul.f32 %v958, %v962
        %v967 = vmul.f32 %v956, %v963
        %v968 = vadd.f32 %v942, %v964
        %v969 = vadd.f32 %v943, %v965
        %v970 = vadd.f32 %v944, %v966
        %v971 = vadd.f32 %v945, %v967
        %972 = vrot.lane.b32.xlu0 %v599, 17
        %v973 = vpop.permute.xlu0 %972
        %974 = vrot.lane.b32.xlu0 %v601, 17
        %v975 = vpop.permute.xlu0 %974
        %976 = vrot.lane.b32.xlu0 %v600, 17
        %v977 = vpop.permute.xlu0 %976
        %978 = vrot.lane.b32.xlu0 %v602, 17
        %v979 = vpop.permute.xlu0 %978
        %v980 = vsel %vm613, %v973, %v977
        %v981 = vsel %vm613, %v975, %v979
        %v982 = vsel %vm613, %v977, %v973
        %v983 = vsel %vm613, %v979, %v975
        %s984 = scalar_lea.vmem [#allocation5], 192
        %v985 = vld [vmem:[%s984] sm:$0xff]
        %v986 = vld [vmem:[%s984 + $0x8] sm:$0xff]
        %v987 = vld [vmem:[%s984 + $0x10] sm:$0xff]
        %v988 = vld [vmem:[%s984 + $0x18] sm:$0xff]
        %v989 = vmul.f32 %v982, %v985
        %v990 = vmul.f32 %v980, %v986
        %v991 = vmul.f32 %v983, %v987
        %v992 = vmul.f32 %v981, %v988
        %v993 = vadd.f32 %v968, %v989
        %v994 = vadd.f32 %v969, %v990
        %v995 = vadd.f32 %v970, %v991
        %v996 = vadd.f32 %v971, %v992
        %997 = vrot.lane.b32.xlu0 %v599, 16
        %v998 = vpop.permute.xlu0 %997
        %999 = vrot.lane.b32.xlu0 %v601, 16
        %v1000 = vpop.permute.xlu0 %999
        %1001 = vrot.lane.b32.xlu0 %v600, 16
        %v1002 = vpop.permute.xlu0 %1001
        %1003 = vrot.lane.b32.xlu0 %v602, 16
        %v1004 = vpop.permute.xlu0 %1003
        %v1005 = vsel %vm634, %v998, %v1002
        %v1006 = vsel %vm634, %v1000, %v1004
        %v1007 = vsel %vm634, %v1002, %v998
        %v1008 = vsel %vm634, %v1004, %v1000
        %s1009 = scalar_lea.vmem [#allocation5], 224
        %v1010 = vld [vmem:[%s1009] sm:$0xff]
        %v1011 = vld [vmem:[%s1009 + $0x8] sm:$0xff]
        %v1012 = vld [vmem:[%s1009 + $0x10] sm:$0xff]
        %v1013 = vld [vmem:[%s1009 + $0x18] sm:$0xff]
        %v1014 = vmul.f32 %v1007, %v1010
        %v1015 = vmul.f32 %v1005, %v1011
        %v1016 = vmul.f32 %v1008, %v1012
        %v1017 = vmul.f32 %v1006, %v1013
        %v1018 = vadd.f32 %v993, %v1014
        %v1019 = vadd.f32 %v994, %v1015
        %v1020 = vadd.f32 %v995, %v1016
        %v1021 = vadd.f32 %v996, %v1017
        %1022 = vrot.lane.b32.xlu0 %v599, 15
        %v1023 = vpop.permute.xlu0 %1022
        %1024 = vrot.lane.b32.xlu0 %v601, 15
        %v1025 = vpop.permute.xlu0 %1024
        %1026 = vrot.lane.b32.xlu0 %v600, 15
        %v1027 = vpop.permute.xlu0 %1026
        %1028 = vrot.lane.b32.xlu0 %v602, 15
        %v1029 = vpop.permute.xlu0 %1028
        %v1030 = vsel %vm660, %v1023, %v1027
        %v1031 = vsel %vm660, %v1025, %v1029
        %v1032 = vsel %vm660, %v1027, %v1023
        %v1033 = vsel %vm660, %v1029, %v1025
        %s1034 = scalar_lea.vmem [#allocation5], 256
        %v1035 = vld [vmem:[%s1034] sm:$0xff]
        %v1036 = vld [vmem:[%s1034 + $0x8] sm:$0xff]
        %v1037 = vld [vmem:[%s1034 + $0x10] sm:$0xff]
        %v1038 = vld [vmem:[%s1034 + $0x18] sm:$0xff]
        %v1039 = vmul.f32 %v1032, %v1035
        %v1040 = vmul.f32 %v1030, %v1036
        %v1041 = vmul.f32 %v1033, %v1037
        %v1042 = vmul.f32 %v1031, %v1038
        %v1043 = vadd.f32 %v1018, %v1039
        %v1044 = vadd.f32 %v1019, %v1040
        %v1045 = vadd.f32 %v1020, %v1041
        %v1046 = vadd.f32 %v1021, %v1042
        %1047 = vrot.lane.b32.xlu0 %v599, 14
        %v1048 = vpop.permute.xlu0 %1047
        %1049 = vrot.lane.b32.xlu0 %v601, 14
        %v1050 = vpop.permute.xlu0 %1049
        %1051 = vrot.lane.b32.xlu0 %v600, 14
        %v1052 = vpop.permute.xlu0 %1051
        %1053 = vrot.lane.b32.xlu0 %v602, 14
        %v1054 = vpop.permute.xlu0 %1053
        %vm1055 = vcmp.lt.s32.totalorder %v612, 14
        %v1056 = vsel %vm1055, %v1048, %v1052
        %v1057 = vsel %vm1055, %v1050, %v1054
        %v1058 = vsel %vm1055, %v1052, %v1048
        %v1059 = vsel %vm1055, %v1054, %v1050
        %s1060 = scalar_lea.vmem [#allocation5], 288
        %v1061 = vld [vmem:[%s1060] sm:$0xff]
        %v1062 = vld [vmem:[%s1060 + $0x8] sm:$0xff]
        %v1063 = vld [vmem:[%s1060 + $0x10] sm:$0xff]
        %v1064 = vld [vmem:[%s1060 + $0x18] sm:$0xff]
        %v1065 = vmul.f32 %v1058, %v1061
        %v1066 = vmul.f32 %v1056, %v1062
        %v1067 = vmul.f32 %v1059, %v1063
        %v1068 = vmul.f32 %v1057, %v1064
        %v1069 = vadd.f32 %v1043, %v1065
        %v1070 = vadd.f32 %v1044, %v1066
        %v1071 = vadd.f32 %v1045, %v1067
        %v1072 = vadd.f32 %v1046, %v1068
        %1073 = vrot.lane.b32.xlu0 %v599, 2
        %v1074 = vpop.permute.xlu0 %1073
        %1075 = vrot.lane.b32.xlu0 %v601, 2
        %v1076 = vpop.permute.xlu0 %1075
        %1077 = vrot.lane.b32.xlu0 %v600, 2
        %v1078 = vpop.permute.xlu0 %1077
        %1079 = vrot.lane.b32.xlu0 %v602, 2
        %v1080 = vpop.permute.xlu0 %1079
        %vm1081 = vcmp.lt.s32.totalorder %v612, 2
        %v1082 = vsel %vm1081, %v1074, %v1078
        %v1083 = vsel %vm1081, %v1076, %v1080
        %v1084 = vsel %vm1081, %v1078, %v1074
        %v1085 = vsel %vm1081, %v1080, %v1076
        %s1086 = scalar_lea.vmem [#allocation5], 320
        %v1087 = vld [vmem:[%s1086] sm:$0xff]
        %v1088 = vld [vmem:[%s1086 + $0x8] sm:$0xff]
        %v1089 = vld [vmem:[%s1086 + $0x10] sm:$0xff]
        %v1090 = vld [vmem:[%s1086 + $0x18] sm:$0xff]
        %v1091 = vmul.f32 %v1084, %v1087
        %v1092 = vmul.f32 %v1082, %v1088
        %v1093 = vmul.f32 %v1085, %v1089
        %v1094 = vmul.f32 %v1083, %v1090
        %v1095 = vadd.f32 %v1069, %v1091
        %v1096 = vadd.f32 %v1070, %v1092
        %v1097 = vadd.f32 %v1071, %v1093
        %v1098 = vadd.f32 %v1072, %v1094
        %1099 = vrot.lane.b32.xlu0 %v599, 1
        %v1100 = vpop.permute.xlu0 %1099
        %1101 = vrot.lane.b32.xlu0 %v601, 1
        %v1102 = vpop.permute.xlu0 %1101
        %1103 = vrot.lane.b32.xlu0 %v600, 1
        %v1104 = vpop.permute.xlu0 %1103
        %1105 = vrot.lane.b32.xlu0 %v602, 1
        %v1106 = vpop.permute.xlu0 %1105
        %v1107 = vsel %vm686, %v1100, %v1104
        %v1108 = vsel %vm686, %v1102, %v1106
        %v1109 = vsel %vm686, %v1104, %v1100
        %v1110 = vsel %vm686, %v1106, %v1102
        %s1111 = scalar_lea.vmem [#allocation5], 352
        %v1112 = vld [vmem:[%s1111] sm:$0xff]
        %v1113 = vld [vmem:[%s1111 + $0x8] sm:$0xff]
        %v1114 = vld [vmem:[%s1111 + $0x10] sm:$0xff]
        %v1115 = vld [vmem:[%s1111 + $0x18] sm:$0xff]
        %v1116 = vmul.f32 %v1109, %v1112
        %v1117 = vmul.f32 %v1107, %v1113
        %v1118 = vmul.f32 %v1110, %v1114
        %v1119 = vmul.f32 %v1108, %v1115
        %v1120 = vadd.f32 %v1095, %v1116
        %v1121 = vadd.f32 %v1096, %v1117
        %v1122 = vadd.f32 %v1097, %v1118
        %v1123 = vadd.f32 %v1098, %v1119
        %s1124 = scalar_lea.vmem [#allocation5], 384
        %v1125 = vld [vmem:[%s1124] sm:$0xff]
        %v1126 = vld [vmem:[%s1124 + $0x8] sm:$0xff]
        %v1127 = vld [vmem:[%s1124 + $0x10] sm:$0xff]
        %v1128 = vld [vmem:[%s1124 + $0x18] sm:$0xff]
        %v1129 = vmul.f32 %v599, %v1125
        %v1130 = vmul.f32 %v600, %v1126
        %v1131 = vmul.f32 %v601, %v1127
        %v1132 = vmul.f32 %v602, %v1128
        %v1133 = vadd.f32 %v1120, %v1129
        %v1134 = vadd.f32 %v1121, %v1130
        %v1135 = vadd.f32 %v1122, %v1131
        %v1136 = vadd.f32 %v1123, %v1132
        %1137 = vrot.lane.b32.xlu0 %v599, 127
        %v1138 = vpop.permute.xlu0 %1137
        %1139 = vrot.lane.b32.xlu0 %v601, 127
        %v1140 = vpop.permute.xlu0 %1139
        %1141 = vrot.lane.b32.xlu0 %v600, 127
        %v1142 = vpop.permute.xlu0 %1141
        %1143 = vrot.lane.b32.xlu0 %v602, 127
        %v1144 = vpop.permute.xlu0 %1143
        %v1145 = vsel %vm725, %v1138, %v1142
        %v1146 = vsel %vm725, %v1140, %v1144
        %v1147 = vsel %vm725, %v1142, %v1138
        %v1148 = vsel %vm725, %v1144, %v1140
        %s1149 = scalar_lea.vmem [#allocation5], 416
        %v1150 = vld [vmem:[%s1149] sm:$0xff]
        %v1151 = vld [vmem:[%s1149 + $0x8] sm:$0xff]
        %v1152 = vld [vmem:[%s1149 + $0x10] sm:$0xff]
        %v1153 = vld [vmem:[%s1149 + $0x18] sm:$0xff]
        %v1154 = vmul.f32 %v1145, %v1150
        %v1155 = vmul.f32 %v1147, %v1151
        %v1156 = vmul.f32 %v1146, %v1152
        %v1157 = vmul.f32 %v1148, %v1153
        %v1158 = vadd.f32 %v1133, %v1154
        %v1159 = vadd.f32 %v1134, %v1155
        %v1160 = vadd.f32 %v1135, %v1156
        %v1161 = vadd.f32 %v1136, %v1157
        %1162 = vrot.lane.b32.xlu0 %v599, 126
        %v1163 = vpop.permute.xlu0 %1162
        %1164 = vrot.lane.b32.xlu0 %v601, 126
        %v1165 = vpop.permute.xlu0 %1164
        %1166 = vrot.lane.b32.xlu0 %v600, 126
        %v1167 = vpop.permute.xlu0 %1166
        %1168 = vrot.lane.b32.xlu0 %v602, 126
        %v1169 = vpop.permute.xlu0 %1168
        %vm1170 = vcmp.lt.s32.totalorder %v612, 126
        %v1171 = vsel %vm1170, %v1163, %v1167
        %v1172 = vsel %vm1170, %v1165, %v1169
        %v1173 = vsel %vm1170, %v1167, %v1163
        %v1174 = vsel %vm1170, %v1169, %v1165
        %s1175 = scalar_lea.vmem [#allocation5], 448
        %v1176 = vld [vmem:[%s1175] sm:$0xff]
        %v1177 = vld [vmem:[%s1175 + $0x8] sm:$0xff]
        %v1178 = vld [vmem:[%s1175 + $0x10] sm:$0xff]
        %v1179 = vld [vmem:[%s1175 + $0x18] sm:$0xff]
        %v1180 = vmul.f32 %v1171, %v1176
        %v1181 = vmul.f32 %v1173, %v1177
        %v1182 = vmul.f32 %v1172, %v1178
        %v1183 = vmul.f32 %v1174, %v1179
        %v1184 = vadd.f32 %v1158, %v1180
        %v1185 = vadd.f32 %v1159, %v1181
        %v1186 = vadd.f32 %v1160, %v1182
        %v1187 = vadd.f32 %v1161, %v1183
        %1188 = vrot.lane.b32.xlu0 %v599, 114
        %v1189 = vpop.permute.xlu0 %1188
        %1190 = vrot.lane.b32.xlu0 %v601, 114
        %v1191 = vpop.permute.xlu0 %1190
        %1192 = vrot.lane.b32.xlu0 %v600, 114
        %v1193 = vpop.permute.xlu0 %1192
        %1194 = vrot.lane.b32.xlu0 %v602, 114
        %v1195 = vpop.permute.xlu0 %1194
        %vm1196 = vcmp.lt.s32.totalorder %v612, 114
        %v1197 = vsel %vm1196, %v1189, %v1193
        %v1198 = vsel %vm1196, %v1191, %v1195
        %v1199 = vsel %vm1196, %v1193, %v1189
        %v1200 = vsel %vm1196, %v1195, %v1191
        %s1201 = scalar_lea.vmem [#allocation5], 480
        %v1202 = vld [vmem:[%s1201] sm:$0xff]
        %v1203 = vld [vmem:[%s1201 + $0x8] sm:$0xff]
        %v1204 = vld [vmem:[%s1201 + $0x10] sm:$0xff]
        %v1205 = vld [vmem:[%s1201 + $0x18] sm:$0xff]
        %v1206 = vmul.f32 %v1197, %v1202
        %v1207 = vmul.f32 %v1199, %v1203
        %v1208 = vmul.f32 %v1198, %v1204
        %v1209 = vmul.f32 %v1200, %v1205
        %v1210 = vadd.f32 %v1184, %v1206
        %v1211 = vadd.f32 %v1185, %v1207
        %v1212 = vadd.f32 %v1186, %v1208
        %v1213 = vadd.f32 %v1187, %v1209
        %1214 = vrot.lane.b32.xlu0 %v599, 113
        %v1215 = vpop.permute.xlu0 %1214
        %1216 = vrot.lane.b32.xlu0 %v601, 113
        %v1217 = vpop.permute.xlu0 %1216
        %1218 = vrot.lane.b32.xlu0 %v600, 113
        %v1219 = vpop.permute.xlu0 %1218
        %1220 = vrot.lane.b32.xlu0 %v602, 113
        %v1221 = vpop.permute.xlu0 %1220
        %v1222 = vsel %vm751, %v1215, %v1219
        %v1223 = vsel %vm751, %v1217, %v1221
        %v1224 = vsel %vm751, %v1219, %v1215
        %v1225 = vsel %vm751, %v1221, %v1217
        %s1226 = scalar_lea.vmem [#allocation5], 512
        %v1227 = vld [vmem:[%s1226] sm:$0xff]
        %v1228 = vld [vmem:[%s1226 + $0x8] sm:$0xff]
        %v1229 = vld [vmem:[%s1226 + $0x10] sm:$0xff]
        %v1230 = vld [vmem:[%s1226 + $0x18] sm:$0xff]
        %v1231 = vmul.f32 %v1222, %v1227
        %v1232 = vmul.f32 %v1224, %v1228
        %v1233 = vmul.f32 %v1223, %v1229
        %v1234 = vmul.f32 %v1225, %v1230
        %v1235 = vadd.f32 %v1210, %v1231
        %v1236 = vadd.f32 %v1211, %v1232
        %v1237 = vadd.f32 %v1212, %v1233
        %v1238 = vadd.f32 %v1213, %v1234
        %1239 = vrot.lane.b32.xlu0 %v599, 112
        %v1240 = vpop.permute.xlu0 %1239
        %1241 = vrot.lane.b32.xlu0 %v601, 112
        %v1242 = vpop.permute.xlu0 %1241
        %1243 = vrot.lane.b32.xlu0 %v600, 112
        %v1244 = vpop.permute.xlu0 %1243
        %1245 = vrot.lane.b32.xlu0 %v602, 112
        %v1246 = vpop.permute.xlu0 %1245
        %v1247 = vsel %vm777, %v1240, %v1244
        %v1248 = vsel %vm777, %v1242, %v1246
        %v1249 = vsel %vm777, %v1244, %v1240
        %v1250 = vsel %vm777, %v1246, %v1242
        %s1251 = scalar_lea.vmem [#allocation5], 544
        %v1252 = vld [vmem:[%s1251] sm:$0xff]
        %v1253 = vld [vmem:[%s1251 + $0x8] sm:$0xff]
        %v1254 = vld [vmem:[%s1251 + $0x10] sm:$0xff]
        %v1255 = vld [vmem:[%s1251 + $0x18] sm:$0xff]
        %v1256 = vmul.f32 %v1247, %v1252
        %v1257 = vmul.f32 %v1249, %v1253
        %v1258 = vmul.f32 %v1248, %v1254
        %v1259 = vmul.f32 %v1250, %v1255
        %v1260 = vadd.f32 %v1235, %v1256
        %v1261 = vadd.f32 %v1236, %v1257
        %v1262 = vadd.f32 %v1237, %v1258
        %v1263 = vadd.f32 %v1238, %v1259
        %1264 = vrot.lane.b32.xlu0 %v599, 111
        %v1265 = vpop.permute.xlu0 %1264
        %1266 = vrot.lane.b32.xlu0 %v601, 111
        %v1267 = vpop.permute.xlu0 %1266
        %1268 = vrot.lane.b32.xlu0 %v600, 111
        %v1269 = vpop.permute.xlu0 %1268
        %1270 = vrot.lane.b32.xlu0 %v602, 111
        %v1271 = vpop.permute.xlu0 %1270
        %v1272 = vsel %vm803, %v1265, %v1269
        %v1273 = vsel %vm803, %v1267, %v1271
        %v1274 = vsel %vm803, %v1269, %v1265
        %v1275 = vsel %vm803, %v1271, %v1267
        %s1276 = scalar_lea.vmem [#allocation5], 576
        %v1277 = vld [vmem:[%s1276] sm:$0xff]
        %v1278 = vld [vmem:[%s1276 + $0x8] sm:$0xff]
        %v1279 = vld [vmem:[%s1276 + $0x10] sm:$0xff]
        %v1280 = vld [vmem:[%s1276 + $0x18] sm:$0xff]
        %v1281 = vmul.f32 %v1272, %v1277
        %v1282 = vmul.f32 %v1274, %v1278
        %v1283 = vmul.f32 %v1273, %v1279
        %v1284 = vmul.f32 %v1275, %v1280
        %v1285 = vadd.f32 %v1260, %v1281
        %v1286 = vadd.f32 %v1261, %v1282
        %v1287 = vadd.f32 %v1262, %v1283
        %v1288 = vadd.f32 %v1263, %v1284
        %1289 = vrot.lane.b32.xlu0 %v599, 110
        %v1290 = vpop.permute.xlu0 %1289
        %1291 = vrot.lane.b32.xlu0 %v601, 110
        %v1292 = vpop.permute.xlu0 %1291
        %1293 = vrot.lane.b32.xlu0 %v600, 110
        %v1294 = vpop.permute.xlu0 %1293
        %1295 = vrot.lane.b32.xlu0 %v602, 110
        %v1296 = vpop.permute.xlu0 %1295
        %vm1297 = vcmp.lt.s32.totalorder %v612, 110
        %v1298 = vsel %vm1297, %v1290, %v1294
        %v1299 = vsel %vm1297, %v1292, %v1296
        %v1300 = vsel %vm1297, %v1294, %v1290
        %v1301 = vsel %vm1297, %v1296, %v1292
        %s1302 = scalar_lea.vmem [#allocation5], 608
        %v1303 = vld [vmem:[%s1302] sm:$0xff]
        %v1304 = vld [vmem:[%s1302 + $0x8] sm:$0xff]
        %v1305 = vld [vmem:[%s1302 + $0x10] sm:$0xff]
        %v1306 = vld [vmem:[%s1302 + $0x18] sm:$0xff]
        %v1307 = vmul.f32 %v1298, %v1303
        %v1308 = vmul.f32 %v1300, %v1304
        %v1309 = vmul.f32 %v1299, %v1305
        %v1310 = vmul.f32 %v1301, %v1306
        %v1311 = vadd.f32 %v1285, %v1307
        %v1312 = vadd.f32 %v1286, %v1308
        %v1313 = vadd.f32 %v1287, %v1309
        %v1314 = vadd.f32 %v1288, %v1310
        %1315 = vrot.lane.b32.xlu0 %v599, 98
        %v1316 = vpop.permute.xlu0 %1315
        %1317 = vrot.lane.b32.xlu0 %v601, 98
        %v1318 = vpop.permute.xlu0 %1317
        %1319 = vrot.lane.b32.xlu0 %v600, 98
        %v1320 = vpop.permute.xlu0 %1319
        %1321 = vrot.lane.b32.xlu0 %v602, 98
        %v1322 = vpop.permute.xlu0 %1321
        %vm1323 = vcmp.lt.s32.totalorder %v612, 98
        %v1324 = vsel %vm1323, %v1316, %v1320
        %v1325 = vsel %vm1323, %v1318, %v1322
        %v1326 = vsel %vm1323, %v1320, %v1316
        %v1327 = vsel %vm1323, %v1322, %v1318
        %s1328 = scalar_lea.vmem [#allocation5], 640
        %v1329 = vld [vmem:[%s1328] sm:$0xff]
        %v1330 = vld [vmem:[%s1328 + $0x8] sm:$0xff]
        %v1331 = vld [vmem:[%s1328 + $0x10] sm:$0xff]
        %v1332 = vld [vmem:[%s1328 + $0x18] sm:$0xff]
        %v1333 = vmul.f32 %v1324, %v1329
        %v1334 = vmul.f32 %v1326, %v1330
        %v1335 = vmul.f32 %v1325, %v1331
        %v1336 = vmul.f32 %v1327, %v1332
        %v1337 = vadd.f32 %v1311, %v1333
        %v1338 = vadd.f32 %v1312, %v1334
        %v1339 = vadd.f32 %v1313, %v1335
        %v1340 = vadd.f32 %v1314, %v1336
        %1341 = vrot.lane.b32.xlu0 %v599, 97
        %v1342 = vpop.permute.xlu0 %1341
        %1343 = vrot.lane.b32.xlu0 %v601, 97
        %v1344 = vpop.permute.xlu0 %1343
        %1345 = vrot.lane.b32.xlu0 %v600, 97
        %v1346 = vpop.permute.xlu0 %1345
        %1347 = vrot.lane.b32.xlu0 %v602, 97
        %v1348 = vpop.permute.xlu0 %1347
        %vm1349 = vcmp.lt.s32.totalorder %v612, 97
        %v1350 = vsel %vm1349, %v1342, %v1346
        %v1351 = vsel %vm1349, %v1344, %v1348
        %v1352 = vsel %vm1349, %v1346, %v1342
        %v1353 = vsel %vm1349, %v1348, %v1344
        %s1354 = scalar_lea.vmem [#allocation5], 672
        %v1355 = vld [vmem:[%s1354] sm:$0xff]
        %v1356 = vld [vmem:[%s1354 + $0x8] sm:$0xff]
        %v1357 = vld [vmem:[%s1354 + $0x10] sm:$0xff]
        %v1358 = vld [vmem:[%s1354 + $0x18] sm:$0xff]
        %v1359 = vmul.f32 %v1350, %v1355
        %v1360 = vmul.f32 %v1352, %v1356
        %v1361 = vmul.f32 %v1351, %v1357
        %v1362 = vmul.f32 %v1353, %v1358
        %v1363 = vadd.f32 %v1337, %v1359
        %v1364 = vadd.f32 %v1338, %v1360
        %v1365 = vadd.f32 %v1339, %v1361
        %v1366 = vadd.f32 %v1340, %v1362
        %1367 = vrot.lane.b32.xlu0 %v599, 96
        %v1368 = vpop.permute.xlu0 %1367
        %1369 = vrot.lane.b32.xlu0 %v601, 96
        %v1370 = vpop.permute.xlu0 %1369
        %1371 = vrot.lane.b32.xlu0 %v600, 96
        %v1372 = vpop.permute.xlu0 %1371
        %1373 = vrot.lane.b32.xlu0 %v602, 96
        %v1374 = vpop.permute.xlu0 %1373
        %vm1375 = vcmp.lt.s32.totalorder %v612, 96
        %v1376 = vsel %vm1375, %v1368, %v1372
        %v1377 = vsel %vm1375, %v1370, %v1374
        %v1378 = vsel %vm1375, %v1372, %v1368
        %v1379 = vsel %vm1375, %v1374, %v1370
        %s1380 = scalar_lea.vmem [#allocation5], 704
        %v1381 = vld [vmem:[%s1380] sm:$0xff]
        %v1382 = vld [vmem:[%s1380 + $0x8] sm:$0xff]
        %v1383 = vld [vmem:[%s1380 + $0x10] sm:$0xff]
        %v1384 = vld [vmem:[%s1380 + $0x18] sm:$0xff]
        %v1385 = vmul.f32 %v1376, %v1381
        %v1386 = vmul.f32 %v1378, %v1382
        %v1387 = vmul.f32 %v1377, %v1383
        %v1388 = vmul.f32 %v1379, %v1384
        %v1389 = vadd.f32 %v1363, %v1385
        %v1390 = vadd.f32 %v1364, %v1386
        %v1391 = vadd.f32 %v1365, %v1387
        %v1392 = vadd.f32 %v1366, %v1388
        %1393 = vrot.lane.b32.xlu0 %v599, 95
        %v1394 = vpop.permute.xlu0 %1393
        %1395 = vrot.lane.b32.xlu0 %v601, 95
        %v1396 = vpop.permute.xlu0 %1395
        %1397 = vrot.lane.b32.xlu0 %v600, 95
        %v1398 = vpop.permute.xlu0 %1397
        %1399 = vrot.lane.b32.xlu0 %v602, 95
        %v1400 = vpop.permute.xlu0 %1399
        %vm1401 = vcmp.lt.s32.totalorder %v612, 95
        %v1402 = vsel %vm1401, %v1394, %v1398
        %v1403 = vsel %vm1401, %v1396, %v1400
        %v1404 = vsel %vm1401, %v1398, %v1394
        %v1405 = vsel %vm1401, %v1400, %v1396
        %s1406 = scalar_lea.vmem [#allocation5], 736
        %v1407 = vld [vmem:[%s1406] sm:$0xff]
        %v1408 = vld [vmem:[%s1406 + $0x8] sm:$0xff]
        %v1409 = vld [vmem:[%s1406 + $0x10] sm:$0xff]
        %v1410 = vld [vmem:[%s1406 + $0x18] sm:$0xff]
        %v1411 = vmul.f32 %v1402, %v1407
        %v1412 = vmul.f32 %v1404, %v1408
        %v1413 = vmul.f32 %v1403, %v1409
        %v1414 = vmul.f32 %v1405, %v1410
        %v1415 = vadd.f32 %v1389, %v1411
        %v1416 = vadd.f32 %v1390, %v1412
        %v1417 = vadd.f32 %v1391, %v1413
        %v1418 = vadd.f32 %v1392, %v1414
        %1419 = vrot.lane.b32.xlu0 %v599, 94
        %v1420 = vpop.permute.xlu0 %1419
        %1421 = vrot.lane.b32.xlu0 %v601, 94
        %v1422 = vpop.permute.xlu0 %1421
        %1423 = vrot.lane.b32.xlu0 %v600, 94
        %v1424 = vpop.permute.xlu0 %1423
        %1425 = vrot.lane.b32.xlu0 %v602, 94
        %v1426 = vpop.permute.xlu0 %1425
        %vm1427 = vcmp.lt.s32.totalorder %v612, 94
        %v1428 = vsel %vm1427, %v1420, %v1424
        %v1429 = vsel %vm1427, %v1422, %v1426
        %v1430 = vsel %vm1427, %v1424, %v1420
        %v1431 = vsel %vm1427, %v1426, %v1422
        %s1432 = scalar_lea.vmem [#allocation5], 768
        %v1433 = vld [vmem:[%s1432] sm:$0xff]
        %v1434 = vld [vmem:[%s1432 + $0x8] sm:$0xff]
        %v1435 = vld [vmem:[%s1432 + $0x10] sm:$0xff]
        %v1436 = vld [vmem:[%s1432 + $0x18] sm:$0xff]
        %v1437 = vmul.f32 %v1428, %v1433
        %v1438 = vmul.f32 %v1430, %v1434
        %v1439 = vmul.f32 %v1429, %v1435
        %v1440 = vmul.f32 %v1431, %v1436
        %v1441 = vadd.f32 %v1415, %v1437
        %v1442 = vadd.f32 %v1416, %v1438
        %v1443 = vadd.f32 %v1417, %v1439
        %v1444 = vadd.f32 %v1418, %v1440
        %v1445 = vld [vmem:[%s5] sm:$0xff]
        %v1446 = vld [vmem:[%s5 + $0x8] sm:$0xff]
        %v1447 = vld [vmem:[%s5 + $0x10] sm:$0xff]
        %v1448 = vld [vmem:[%s5 + $0x18] sm:$0xff]
        %1450 = vset.pattern.permute.xlu0 0
        %1451 = vperm.xlu0 %1450, %v1445
        %v1452 = vpop.permute.xlu0 %1451
        %1455 = vset.pattern.permute.xlu0 0
        %1456 = vperm.xlu0 %1455, %v1446
        %v1457 = vpop.permute.xlu0 %1456
        %1460 = vset.pattern.permute.xlu0 0
        %1461 = vperm.xlu0 %1460, %v1447
        %v1462 = vpop.permute.xlu0 %1461
        %1465 = vset.pattern.permute.xlu0 0
        %1466 = vperm.xlu0 %1465, %v1448
        %v1467 = vpop.permute.xlu0 %1466
        %v1469 = vadd.f32 %v817, %v1452
        %v1470 = vadd.f32 %v818, %v1452
        %v1471 = vadd.f32 %v819, %v1457
        %v1472 = vadd.f32 %v820, %v1457
        %v1473 = vadd.f32 %v1441, %v1462
        %v1474 = vadd.f32 %v1442, %v1462
        %v1475 = vadd.f32 %v1443, %v1467
        %v1476 = vadd.f32 %v1444, %v1467
        %v1477 = vxor.u32 %v1469, 2147483648
        %v1478 = vxor.u32 %v1470, 2147483648
        %v1479 = vxor.u32 %v1471, 2147483648
        %v1480 = vxor.u32 %v1472, 2147483648
        %v1481 = vxor.u32 %v1473, 2147483648
        %v1482 = vxor.u32 %v1474, 2147483648
        %v1483 = vxor.u32 %v1475, 2147483648
        %v1484 = vxor.u32 %v1476, 2147483648
        %v1485 = vmul.f32 %v1477, 1.442695
        %v1486 = vpow.pop %v1485
        %v1487 = vmul.f32 %v1478, 1.442695
        %v1488 = vpow.pop %v1487
        %v1489 = vmul.f32 %v1479, 1.442695
        %v1490 = vpow.pop %v1489
        %v1491 = vmul.f32 %v1480, 1.442695
        %v1492 = vpow.pop %v1491
        %v1493 = vmul.f32 %v1481, 1.442695
        %v1494 = vpow.pop %v1493
        %v1495 = vmul.f32 %v1482, 1.442695
        %v1496 = vpow.pop %v1495
        %v1497 = vmul.f32 %v1483, 1.442695
        %v1498 = vpow.pop %v1497
        %v1499 = vmul.f32 %v1484, 1.442695
        %v1500 = vpow.pop %v1499
        %v1501 = vadd.f32 %v1486, 1.0
        %v1502 = vadd.f32 %v1488, 1.0
        %v1503 = vadd.f32 %v1490, 1.0
        %v1504 = vadd.f32 %v1492, 1.0
        %v1505 = vadd.f32 %v1494, 1.0
        %v1506 = vadd.f32 %v1496, 1.0
        %v1507 = vadd.f32 %v1498, 1.0
        %v1508 = vadd.f32 %v1500, 1.0
        %v1509 = vrcp.pop %v1501
        %v1510 = vmul.f32 1.0, %v1509
        %v1511 = vrcp.pop %v1502
        %v1512 = vmul.f32 1.0, %v1511
        %v1513 = vrcp.pop %v1503
        %v1514 = vmul.f32 1.0, %v1513
        %v1515 = vrcp.pop %v1504
        %v1516 = vmul.f32 1.0, %v1515
        %v1517 = vrcp.pop %v1505
        %v1518 = vmul.f32 1.0, %v1517
        %v1519 = vrcp.pop %v1506
        %v1520 = vmul.f32 1.0, %v1519
        %v1521 = vrcp.pop %v1507
        %v1522 = vmul.f32 1.0, %v1521
        %v1523 = vrcp.pop %v1508
        %v1524 = vmul.f32 1.0, %v1523
        %v1525 = vmul.f32 %v1469, %v1510
        %v1526 = vmul.f32 %v1470, %v1512
        %v1527 = vmul.f32 %v1471, %v1514
        %v1528 = vmul.f32 %v1472, %v1516
        %v1529 = vmul.f32 %v1473, %v1518
        %v1530 = vmul.f32 %v1474, %v1520
        %v1531 = vmul.f32 %v1475, %v1522
        %v1532 = vmul.f32 %v1476, %v1524
        %v1533 = vadd.f32 %v1525, %v1526
        %1534 = vadd.xlane.f32.xlu0 %v1533
        %v1535 = vpop.xlane.xlu0 %1534
        %v1536 = vadd.f32 %v1527, %v1528
        %1537 = vadd.xlane.f32.xlu0 %v1536
        %v1538 = vpop.xlane.xlu0 %1537
        %v1539 = vadd.f32 %v1529, %v1530
        %1540 = vadd.xlane.f32.xlu0 %v1539
        %v1541 = vpop.xlane.xlu0 %1540
        %v1542 = vadd.f32 %v1531, %v1532
        %1543 = vadd.xlane.f32.xlu0 %v1542
        %v1544 = vpop.xlane.xlu0 %1543
        %v1545 = vrcp.pop 256.0
        %v1546 = vmul.f32 %v1535, %v1545
        %v1547 = vmul.f32 %v1538, %v1545
        %v1548 = vmul.f32 %v1541, %v1545
        %v1549 = vmul.f32 %v1544, %v1545
        %v1550 = vld [vmem:[%s6] sm:$0xff]
        %v1551 = vld [vmem:[%s6 + $0x8] sm:$0xff]
        %v1552 = vld [vmem:[%s7] sm:$0xff]
        %v1553 = vld [vmem:[%s7 + $0x8] sm:$0xff]
        %vm1554 = vcmask 261120
        %v1556 = vsel %vm1554, %v1550, 0
        %v1559 = vsel %vm1554, %v1551, 0
        %1561 = vmatprep.subr.mxu0 0.0
        %1562 = vmatpush1.msra.mxu0 0.0
        %1563 = vmatprep.subr.mxu0 0.0
        %1564 = vmatpush1.msra.mxu0 0.0
        %1565 = vmatprep.subr.mxu0 0.0
        %1566 = vmatpush1.msra.mxu0 0.0
        %1567 = vmatprep.subr.mxu0 0.0
        %1568 = vmatpush1.msra.mxu0 0.0
        %1569 = vmatprep.subr.mxu0 0.0
        %1570 = vmatpush1.msra.mxu0 0.0
        %1571 = vmatprep.subr.mxu0 0.0
        %1572 = vmatpush1.msra.mxu0 0.0
        %1573 = vmatprep.subr.mxu0 0.0
        %1574 = vmatpush1.msra.mxu0 0.0
        %1575 = vmatprep.subr.mxu0 0.0
        %1576 = vmatpush1.msra.mxu0 0.0
        %1577 = vmatprep.subr.mxu0 0.0
        %1578 = vmatpush1.msra.mxu0 0.0
        %1579 = vmatprep.subr.mxu0 0.0
        %1580 = vmatpush1.msra.mxu0 0.0
        %1581 = vmatprep.subr.mxu0 0.0
        %1582 = vmatpush1.msra.mxu0 0.0
        %1583 = vmatprep.subr.mxu0 0.0
        %1584 = vmatpush1.msra.mxu0 0.0
        %1585 = vmatprep.subr.mxu0 0.0
        %1586 = vmatpush1.msra.mxu0 %v1549
        %1587 = vmatprep.subr.mxu0 0.0
        %1588 = vmatpush1.msra.mxu0 %v1548
        %1589 = vmatprep.subr.mxu0 0.0
        %1590 = vmatpush1.msra.mxu0 %v1547
        %1591 = vmatprep.subr.mxu0 0.0
        %1592 = vmatpush1.msra.mxu0 %v1546
        %1593 = vmatprep.subr.mxu0 0.0
        %1594 = vmatpush2.msra.mxu0 0.0
        %1595 = vmatprep.subr.mxu0 0.0
        %1596 = vmatpush2.msra.mxu0 0.0
        %1597 = vmatprep.subr.mxu0 0.0
        %1598 = vmatpush2.msra.mxu0 0.0
        %1599 = vmatprep.subr.mxu0 0.0
        %1600 = vmatpush2.msra.mxu0 0.0
        %1601 = vmatprep.subr.mxu0 0.0
        %1602 = vmatpush2.msra.mxu0 0.0
        %1603 = vmatprep.subr.mxu0 0.0
        %1604 = vmatpush2.msra.mxu0 0.0
        %1605 = vmatprep.subr.mxu0 0.0
        %1606 = vmatpush2.msra.mxu0 0.0
        %1607 = vmatprep.subr.mxu0 0.0
        %1608 = vmatpush2.msra.mxu0 0.0
        %1609 = vmatprep.subr.mxu0 0.0
        %1610 = vmatpush2.msra.mxu0 0.0
        %1611 = vmatprep.subr.mxu0 0.0
        %1612 = vmatpush2.msra.mxu0 0.0
        %1613 = vmatprep.subr.mxu0 0.0
        %1614 = vmatpush2.msra.mxu0 0.0
        %1615 = vmatprep.subr.mxu0 0.0
        %1616 = vmatpush2.msra.mxu0 0.0
        %1617 = vmatprep.subr.mxu0 0.0
        %1618 = vmatpush2.msra.mxu0 0.0
        %1619 = vmatprep.subr.mxu0 0.0
        %1620 = vmatpush2.msra.mxu0 0.0
        %1621 = vmatprep.subr.mxu0 0.0
        %1622 = vmatpush2.msra.mxu0 0.0
        %1623 = vmatprep.subr.mxu0 0.0
        %1624 = vmatpush2.msra.mxu0 0.0
        %1625 = vmatprep.mubr.f32.mxu0 0.0
        %1626 = vmatmul.mubr.f32.gmra.mxu0 %v1556
        %v1627 = vpop.f32.mrf.mxu0
        %v1628 = vadd.f32 %v1552, %v1627
        %v1629 = vpop.f32.mrf.mxu0
        %1630 = vmatprep.mubr.f32.mxu0 0.0
        %1631 = vmatmul.mubr.f32.gmra.mxu0 %v1559
        %v1632 = vpop.f32.mrf.mxu0
        %v1633 = vadd.f32 %v1553, %v1632
        %v1634 = vpop.f32.mrf.mxu0
        %1635 = vdwg.mxu0
        %v1636 = vxor.u32 %v1628, 2147483648
        %v1637 = vxor.u32 %v1633, 2147483648
        %v1638 = vmul.f32 %v1636, 1.442695
        %v1639 = vpow.pop %v1638
        %v1640 = vmul.f32 %v1637, 1.442695
        %v1641 = vpow.pop %v1640
        %v1642 = vadd.f32 %v1639, 1.0
        %v1643 = vadd.f32 %v1641, 1.0
        %v1644 = vrcp.pop %v1642
        %v1645 = vmul.f32 1.0, %v1644
        %v1646 = vrcp.pop %v1643
        %v1647 = vmul.f32 1.0, %v1646
        %v1648 = vmul.f32 %v1628, %v1645
        %v1649 = vmul.f32 %v1633, %v1647
        %v1650 = vld [vmem:[%s8] sm:$0xff]
        %v1651 = vld [vmem:[%s8 + $0x8] sm:$0xff]
        %v1652 = vld [vmem:[%s8 + $0x10] sm:$0xff]
        %v1653 = vld [vmem:[%s8 + $0x18] sm:$0xff]
        %v1654 = vld [vmem:[%s9] sm:$0xff]
        %v1655 = vld [vmem:[%s9 + $0x8] sm:$0xff]
        %v1656 = vld [vmem:[%s9 + $0x10] sm:$0xff]
        %v1657 = vld [vmem:[%s9 + $0x18] sm:$0xff]
        %v1659 = vsel %vm487, %v1650, 0
        %v1662 = vsel %vm487, %v1651, 0
        %v1665 = vsel %vm487, %v1652, 0
        %v1668 = vsel %vm487, %v1653, 0
        %1670 = vmatprep.subr.mxu0 0.0
        %1671 = vmatpush1.msra.mxu0 0.0
        %1672 = vmatprep.subr.mxu0 0.0
        %1673 = vmatpush1.msra.mxu0 0.0
        %1674 = vmatprep.subr.mxu0 0.0
        %1675 = vmatpush1.msra.mxu0 0.0
        %1676 = vmatprep.subr.mxu0 0.0
        %1677 = vmatpush1.msra.mxu0 0.0
        %1678 = vmatprep.subr.mxu0 0.0
        %1679 = vmatpush1.msra.mxu0 0.0
        %1680 = vmatprep.subr.mxu0 0.0
        %1681 = vmatpush1.msra.mxu0 0.0
        %1682 = vmatprep.subr.mxu0 0.0
        %1683 = vmatpush1.msra.mxu0 0.0
        %1684 = vmatprep.subr.mxu0 0.0
        %1685 = vmatpush1.msra.mxu0 0.0
        %1686 = vmatprep.subr.mxu0 0.0
        %1687 = vmatpush1.msra.mxu0 0.0
        %1688 = vmatprep.subr.mxu0 0.0
        %1689 = vmatpush1.msra.mxu0 0.0
        %1690 = vmatprep.subr.mxu0 0.0
        %1691 = vmatpush1.msra.mxu0 0.0
        %1692 = vmatprep.subr.mxu0 0.0
        %1693 = vmatpush1.msra.mxu0 0.0
        %1694 = vmatprep.subr.mxu0 0.0
        %1695 = vmatpush1.msra.mxu0 0.0
        %1696 = vmatprep.subr.mxu0 0.0
        %1697 = vmatpush1.msra.mxu0 0.0
        %1698 = vmatprep.subr.mxu0 0.0
        %1699 = vmatpush1.msra.mxu0 %v1649
        %1700 = vmatprep.subr.mxu0 0.0
        %1701 = vmatpush1.msra.mxu0 %v1648
        %1702 = vmatprep.subr.mxu0 0.0
        %1703 = vmatpush2.msra.mxu0 0.0
        %1704 = vmatprep.subr.mxu0 0.0
        %1705 = vmatpush2.msra.mxu0 0.0
        %1706 = vmatprep.subr.mxu0 0.0
        %1707 = vmatpush2.msra.mxu0 0.0
        %1708 = vmatprep.subr.mxu0 0.0
        %1709 = vmatpush2.msra.mxu0 0.0
        %1710 = vmatprep.subr.mxu0 0.0
        %1711 = vmatpush2.msra.mxu0 0.0
        %1712 = vmatprep.subr.mxu0 0.0
        %1713 = vmatpush2.msra.mxu0 0.0
        %1714 = vmatprep.subr.mxu0 0.0
        %1715 = vmatpush2.msra.mxu0 0.0
        %1716 = vmatprep.subr.mxu0 0.0
        %1717 = vmatpush2.msra.mxu0 0.0
        %1718 = vmatprep.subr.mxu0 0.0
        %1719 = vmatpush2.msra.mxu0 0.0
        %1720 = vmatprep.subr.mxu0 0.0
        %1721 = vmatpush2.msra.mxu0 0.0
        %1722 = vmatprep.subr.mxu0 0.0
        %1723 = vmatpush2.msra.mxu0 0.0
        %1724 = vmatprep.subr.mxu0 0.0
        %1725 = vmatpush2.msra.mxu0 0.0
        %1726 = vmatprep.subr.mxu0 0.0
        %1727 = vmatpush2.msra.mxu0 0.0
        %1728 = vmatprep.subr.mxu0 0.0
        %1729 = vmatpush2.msra.mxu0 0.0
        %1730 = vmatprep.subr.mxu0 0.0
        %1731 = vmatpush2.msra.mxu0 0.0
        %1732 = vmatprep.subr.mxu0 0.0
        %1733 = vmatpush2.msra.mxu0 0.0
        %1734 = vmatprep.mubr.f32.mxu0 0.0
        %1735 = vmatmul.mubr.f32.gmra.mxu0 %v1659
        %v1736 = vpop.f32.mrf.mxu0
        %v1737 = vadd.f32 %v1654, %v1736
        %v1738 = vpop.f32.mrf.mxu0
        %1739 = vmatprep.mubr.f32.mxu0 0.0
        %1740 = vmatmul.mubr.f32.gmra.mxu0 %v1662
        %v1741 = vpop.f32.mrf.mxu0
        %v1742 = vadd.f32 %v1655, %v1741
        %v1743 = vpop.f32.mrf.mxu0
        %1744 = vmatprep.mubr.f32.mxu0 0.0
        %1745 = vmatmul.mubr.f32.gmra.mxu0 %v1665
        %v1746 = vpop.f32.mrf.mxu0
        %v1747 = vadd.f32 %v1656, %v1746
        %v1748 = vpop.f32.mrf.mxu0
        %1749 = vmatprep.mubr.f32.mxu0 0.0
        %1750 = vmatmul.mubr.f32.gmra.mxu0 %v1668
        %v1751 = vpop.f32.mrf.mxu0
        %v1752 = vadd.f32 %v1657, %v1751
        %v1753 = vpop.f32.mrf.mxu0
        %1754 = vdwg.mxu0
        %v1755 = vxor.u32 %v1737, 2147483648
        %v1756 = vxor.u32 %v1742, 2147483648
        %v1757 = vxor.u32 %v1747, 2147483648
        %v1758 = vxor.u32 %v1752, 2147483648
        %v1759 = vmul.f32 %v1755, 1.442695
        %v1760 = vpow.pop %v1759
        %v1761 = vmul.f32 %v1756, 1.442695
        %v1762 = vpow.pop %v1761
        %v1763 = vmul.f32 %v1757, 1.442695
        %v1764 = vpow.pop %v1763
        %v1765 = vmul.f32 %v1758, 1.442695
        %v1766 = vpow.pop %v1765
        %v1767 = vadd.f32 %v1760, 1.0
        %v1768 = vadd.f32 %v1762, 1.0
        %v1769 = vadd.f32 %v1764, 1.0
        %v1770 = vadd.f32 %v1766, 1.0
        %v1771 = vrcp.pop %v1767
        %v1772 = vmul.f32 1.0, %v1771
        %v1773 = vrcp.pop %v1768
        %v1774 = vmul.f32 1.0, %v1773
        %v1775 = vrcp.pop %v1769
        %v1776 = vmul.f32 1.0, %v1775
        %v1777 = vrcp.pop %v1770
        %v1778 = vmul.f32 1.0, %v1777
        %1780 = vset.pattern.permute.xlu0 0
        %1781 = vperm.xlu0 %1780, %v1772
        %v1782 = vpop.permute.xlu0 %1781
        %1785 = vset.pattern.permute.xlu0 0
        %1786 = vperm.xlu0 %1785, %v1774
        %v1787 = vpop.permute.xlu0 %1786
        %1790 = vset.pattern.permute.xlu0 0
        %1791 = vperm.xlu0 %1790, %v1776
        %v1792 = vpop.permute.xlu0 %1791
        %1795 = vset.pattern.permute.xlu0 0
        %1796 = vperm.xlu0 %1795, %v1778
        %v1797 = vpop.permute.xlu0 %1796
        %v1799 = vmul.f32 %v1525, %v1782
        %v1800 = vmul.f32 %v1526, %v1782
        %v1801 = vmul.f32 %v1527, %v1787
        %v1802 = vmul.f32 %v1528, %v1787
        %v1803 = vmul.f32 %v1529, %v1792
        %v1804 = vmul.f32 %v1530, %v1792
        %v1805 = vmul.f32 %v1531, %v1797
        %v1806 = vmul.f32 %v1532, %v1797
        %v1807 = vld [vmem:[%s10] sm:$0xf]
        %v1808 = vld [vmem:[%s10 + $0x4] sm:$0xf]
        %v1809 = vpack.c.bf16 %v1801, %v1799
        %v1810 = vpack.c.bf16 %v1802, %v1800
        %v1811 = vpack.c.bf16 %v1805, %v1803
        %v1812 = vpack.c.bf16 %v1806, %v1804
        %v1813 = vld [vmem:[%s11] sm:$0xff]
        %v1814 = vld [vmem:[%s11 + $0x8] sm:$0xff]
        %1816 = vset.pattern.permute.xlu0 0
        %1817 = vperm.xlu0 %1816, %v1813
        %v1818 = vpop.permute.xlu0 %1817
        %1821 = vset.pattern.permute.xlu0 0
        %1822 = vperm.xlu0 %1821, %v1814
        %v1823 = vpop.permute.xlu0 %1822
        %v1827 = vunpack.c.l.b16 %v1807
        %v1828 = vunpack.c.l.b16 %v1808
        %v1829 = vpack.c.b16 %v1828, %v1827
        %v1831 = vsel %vm1554, %v1829, 0
        %1833 = vmatprep.subr.bf16.mxu0 0
        %1834 = vmatpush1.bf16.msra.mxu0 0
        %1835 = vmatprep.subr.bf16.mxu0 0
        %1836 = vmatpush1.bf16.msra.mxu0 0
        %1837 = vmatprep.subr.bf16.mxu0 0
        %1838 = vmatpush1.bf16.msra.mxu0 0
        %1839 = vmatprep.subr.bf16.mxu0 0
        %1840 = vmatpush1.bf16.msra.mxu0 0
        %1841 = vmatprep.subr.bf16.mxu0 0
        %1842 = vmatpush1.bf16.msra.mxu0 0
        %1843 = vmatprep.subr.bf16.mxu0 0
        %1844 = vmatpush1.bf16.msra.mxu0 0
        %1845 = vmatprep.subr.bf16.mxu0 %v1812
        %1846 = vmatpush1.bf16.msra.mxu0 %v1811
        %1847 = vmatprep.subr.bf16.mxu0 %v1810
        %1848 = vmatpush1.bf16.msra.mxu0 %v1809
        %1849 = vmatprep.subr.bf16.mxu0 0
        %1850 = vmatpush2.bf16.msra.mxu0 0
        %1851 = vmatprep.subr.bf16.mxu0 0
        %1852 = vmatpush2.bf16.msra.mxu0 0
        %1853 = vmatprep.subr.bf16.mxu0 0
        %1854 = vmatpush2.bf16.msra.mxu0 0
        %1855 = vmatprep.subr.bf16.mxu0 0
        %1856 = vmatpush2.bf16.msra.mxu0 0
        %1857 = vmatprep.subr.bf16.mxu0 0
        %1858 = vmatpush2.bf16.msra.mxu0 0
        %1859 = vmatprep.subr.bf16.mxu0 0
        %1860 = vmatpush2.bf16.msra.mxu0 0
        %1861 = vmatprep.subr.bf16.mxu0 0
        %1862 = vmatpush2.bf16.msra.mxu0 0
        %1863 = vmatprep.subr.bf16.mxu0 0
        %1864 = vmatpush2.bf16.msra.mxu0 0
        %1865 = vmatprep.mubr.bf16.mxu0 0
        %1866 = vmatmul.mubr.bf16.gmra.mxu0 %v1831
        %v1867 = vpop.f32.mrf.mxu0
        %v1868 = vadd.f32 %v1818, %v1867
        %v1869 = vpop.f32.mrf.mxu0
        %v1870 = vadd.f32 %v1818, %v1869
        %v1871 = vpop.f32.mrf.mxu0
        %v1872 = vadd.f32 %v1823, %v1871
        %v1873 = vpop.f32.mrf.mxu0
        %v1874 = vadd.f32 %v1823, %v1873
        %1875 = vdwg.mxu0
        %v1876 = vadd.f32 %v1868, %v443
        %v1877 = vadd.f32 %v1870, %v444
        %v1878 = vadd.f32 %v1872, %v445
        %v1879 = vadd.f32 %v1874, %v446
        %1880 = vst [vmem:[%s436] sm:$0xff] %v1876
        %1881 = vst [vmem:[%s436 + $0x8] sm:$0xff] %v1877
        %1882 = vst [vmem:[%s436 + $0x10] sm:$0xff] %v1878
        %1883 = vst [vmem:[%s436 + $0x18] sm:$0xff] %v1879
        %s1884 = sand.u32 %s293, 1
        %s1885 = scalar_lea.sflag [#allocation4], %s1884
        %s1886 = sand.u32 %s293, 1
        %s1887 = smul.addr %s1886, 32
        %s1888 = scalar_lea.vmem [#allocation7], %s1887
        // Predicated region
        $region77: #{tpu_custom_call.1} parent=67 // pred_check
          %p1889 = pneg %p303
        $region78: #{tpu_custom_call.1} parent=67 // pred_check_branch
          %1891 = sbr.rel (%p1889) target = $region80
        $region79: #{tpu_custom_call.1} parent=67 // pred_region
          %s1893 = ssub.s32 512, 512
          %1894 = vsyncadd %s1885, %s1893
          %s1895 = smul.addr %s28, 4
          %s1896 = smul.addr %s1895, 128
          %s1897 = scalar_lea.hbm %s12, %s1896
          %s1898 = sshll.u32 %s1888, 4
          %s1899 = int_to_ptr.vmem [resolvable:$true] %s1898
          %1904 = dma.vmem_to_hbm [thread:$0]  %s1899, 512, %s1897, %s1885, 256, 256, 16
        $region80: #{tpu_custom_call.1} parent=67 // pred_fallthru
          _
      $region68: #{tpu_custom_call.1} parent=5 // pred_fallthru
        _
      %p1905 = scmp.le.s32.totalorder 2, %s23
      // Predicated region
      $region81: #{tpu_custom_call.1} parent=5 // pred_check
        %p1906 = pneg %p1905
      $region82: #{tpu_custom_call.1} parent=5 // pred_check_branch
        %1908 = sbr.rel (%p1906) target = $region84
      $region83: #{tpu_custom_call.1} parent=5 // pred_region
        %s1909 = ssub.s32 %s23, 2
        // Predicated region
        $region85: #{tpu_custom_call.1} parent=83 // pred_check
          %p1910 = pneg %p309
        $region86: #{tpu_custom_call.1} parent=83 // pred_check_branch
          %1912 = sbr.rel (%p1910) target = $region88
        $region87: #{tpu_custom_call.1} parent=83 // pred_region
          %s1913 = sand.u32 %s294, 1
          %s1914 = scalar_lea.sflag [#allocation4], %s1913
          %s1915 = sand.u32 %s294, 1
          %s1916 = smul.addr %s1915, 32
          %s1917 = scalar_lea.vmem [#allocation7], %s1916
          %1918 = dma.done %s1914, 512
        $region88: #{tpu_custom_call.1} parent=83 // pred_fallthru
          _
      $region84: #{tpu_custom_call.1} parent=5 // pred_fallthru
        _
    $region6: #{tpu_custom_call.1} parent=1 // loop_footer
      %s27 = sadd.s32 1, %s23
    $region7: #{tpu_custom_call.1} parent=1 // loop_footer_branch
      %22 = sbr.rel target = $region3
    $region8: #{tpu_custom_call.1} parent=1 // loop_exit
      _
    %1919 = vsyncpa [#allocation3], 1
    %s1920 = scalar_lea.sflag [#allocation3], 1
    %1921 = vsyncpa %s1920, 1
    %1922 = vsyncpa [#allocation6], 1
    %1923 = vsyncpa [#allocation4], 1
    %s1924 = scalar_lea.sflag [#allocation4], 1
    %1925 = vsyncpa %s1924, 1

</llo_original>
